<compile_context>
chip_gen: v7x
topology: tpu7x:2x2x1
jax: 0.10.0
libtpu: 0.0.40
codegen_flags: <defaults>
</compile_context>

<pallas_src>
import functools
import math

import jax
import jax.numpy as jnp
from jax.experimental import pallas as pl
from jax.experimental.pallas import tpu as pltpu


def _round_up(x, m):
    return (x + m - 1) // m * m


def _gnn_layer_kernel(a_ref, hs_ref, h_ref, norm_ref, w_ref, out_ref, acc_ref,
                      *, gamma, tm):
    k = pl.program_id(1)

    @pl.when(k == 0)
    def _init():
        acc_ref[...] = jnp.zeros_like(acc_ref)

    # --- MPConv aggregation: acc += A_tile @ (norm * h)_tile  (bf16 MXU, f32 accumulate) ---
    a = a_ref[...].astype(jnp.bfloat16)                     # binary adjacency tile (exact in bf16)
    acc_ref[...] += jnp.dot(a, hs_ref[...],
                            preferred_element_type=jnp.float32)

    @pl.when(k == pl.num_programs(1) - 1)
    def _finalize():
        norm = norm_ref[...]                                # (tm, 1) f32, destination-side scale
        m = acc_ref[...] * norm                             # MPConv output
        # F.normalize: x / max(||x||, 1e-12) == x * rsqrt(max(sum x^2, 1e-24))
        inv_m = jax.lax.rsqrt(
            jnp.maximum(jnp.sum(m * m, axis=1, keepdims=True), 1e-24))
        mn = (m * inv_m).astype(jnp.bfloat16)

        # Fused W matmul for both -layer(mn) and layer(temp_h): single weight push.
        lhs = jnp.concatenate([mn, h_ref[...]], axis=0)     # (2*tm, Din) bf16
        both = jnp.dot(lhs, w_ref[...],
                       preferred_element_type=jnp.float32)  # (2*tm, Dout) f32
        t = -both[:tm, :]
        skip = both[tm:, :]

        inv_t = jax.lax.rsqrt(
            jnp.maximum(jnp.sum(t * t, axis=1, keepdims=True), 1e-24))
        out_ref[...] = t * inv_t + gamma * skip             # lean epilogue, direct store


def gnn_layer(a_i8, hs, h, norm, w, *, gamma, tm, tk):
    """One GNN_high layer on padded operands.

    a_i8: (Np, Np) int8 binary adjacency (A[dst, src]).
    hs:   (Np, Din) bf16 = norm * h  (source-side scaled features, streamed over k).
    h:    (Np, Din) bf16 (unscaled features, for the gamma*layer(temp_h) skip).
    norm: (Np, 1)   f32  = in_deg.clamp(1)^-0.5 (destination-side scale).
    w:    (Din, Dout) bf16 (PyTorch Linear weight, transposed), dims multiples of 128.
    """
    np_, din = hs.shape
    dout = w.shape[1]
    grid = (np_ // tm, np_ // tk)
    kernel = functools.partial(_gnn_layer_kernel, gamma=float(gamma), tm=tm)
    return pl.pallas_call(
        kernel,
        out_shape=jax.ShapeDtypeStruct((np_, dout), jnp.float32),
        grid=grid,
        in_specs=[
            pl.BlockSpec((tm, tk), lambda i, k: (i, k)),     # A: dominant HBM stream
            pl.BlockSpec((tk, din), lambda i, k: (k, 0)),    # hs, contraction tiles
            pl.BlockSpec((tm, din), lambda i, k: (i, 0)),    # h, row tiles (skip path)
            pl.BlockSpec((tm, 1), lambda i, k: (i, 0)),      # norm, row tiles
            pl.BlockSpec((din, dout), lambda i, k: (0, 0)),  # W, VMEM-resident
        ],
        out_specs=pl.BlockSpec((tm, dout), lambda i, k: (i, 0)),
        scratch_shapes=[pltpu.VMEM((tm, din), jnp.float32)],
        compiler_params=pltpu.CompilerParams(
            dimension_semantics=("parallel", "arbitrary"),
            vmem_limit_bytes=32 * 1024 * 1024,
        ),
    )(a_i8, hs, h, norm, w)


def gnn_high_forward(feat, A, weights, gamma=0.3, tm=None, tk=None):
    """Full GNN_high.forward. Returns (h, embed); embed == h of the last layer."""
    # TODO(synk): dense adjacency is O(N^2); a sparse/gather formulation is an algorithmic change.
    N, d_in0 = feat.shape

    # Degree normalization of the real (unpadded) graph.
    in_deg = jnp.sum(A.astype(jnp.float32), axis=1)
    norm = jnp.power(jnp.clip(in_deg, 1.0), -0.5).reshape(-1, 1)

    # Tile sizes: sized to fit comfortably on v5e/v6e/v7x VMEM (re-derive per chip if changed).
    if tm is None:
        tm = 256 if N > 256 else 128
    if tk is None:
        tk = 512 if N > 512 else 128
    n_pad = _round_up(max(N, 1), math.lcm(tm, tk))

    # Pad graph to (n_pad, n_pad); keep A binary in int8 (padded rows/cols have no edges).
    a_i8 = jnp.zeros((n_pad, n_pad), jnp.int8).at[:N, :N].set(
        (A != 0).astype(jnp.int8))
    norm_p = jnp.ones((n_pad, 1), jnp.float32).at[:N, :].set(norm)

    # Pad features to lane-dense width (multiple of 128); padded rows/cols are exactly zero.
    d0 = _round_up(d_in0, 128)
    h = jnp.zeros((n_pad, d0), jnp.float32).at[:N, :d_in0].set(
        feat.astype(jnp.float32))

    embed = None
    for i, W in enumerate(weights):
        din, dout = W.shape
        din_p, dout_p = _round_up(din, 128), _round_up(dout, 128)
        assert h.shape[1] == din_p
        w_p = jnp.zeros((din_p, dout_p), jnp.bfloat16).at[:din, :dout].set(
            W.astype(jnp.bfloat16))
        hs = (h * norm_p).astype(jnp.bfloat16)
        h = gnn_layer(a_i8, hs, h.astype(jnp.bfloat16), norm_p, w_p,
                      gamma=gamma, tm=tm, tk=tk)          # (n_pad, dout_p) f32
        if i == len(weights) - 1:
            embed = h[:N, :dout]
    return h[:N, :weights[-1].shape[1]], embed


def _reference_forward_f32(feat, A, weights, gamma=0.3):
    """Pure-JAX f32 reference mirroring the PyTorch semantics exactly."""
    in_deg = jnp.sum(A, axis=1)
    norm = jnp.power(jnp.clip(in_deg, 1.0), -0.5).reshape(-1, 1)

    def l2n(x):
        n = jnp.sqrt(jnp.sum(x * x, axis=1, keepdims=True))
        return x / jnp.maximum(n, 1e-12)

    h = feat.astype(jnp.float32)
    for i, W in enumerate(weights):
        temp_h = h
        h = l2n(norm * (A @ (norm * h)))
        h = -(h @ W)
        h = l2n(h) + gamma * (temp_h @ W)
        if i == len(weights) - 1:
            embed = h
    return h, embed


def _reference_forward_bf16(feat, A, weights, gamma=0.3):
    """Pure-JAX reference with the same bf16 quantization points as the kernel."""
    in_deg = jnp.sum(A, axis=1)
    norm = jnp.power(jnp.clip(in_deg, 1.0), -0.5).reshape(-1, 1)

    def l2n(x):
        return x * jax.lax.rsqrt(
            jnp.maximum(jnp.sum(x * x, axis=1, keepdims=True), 1e-24))

    h = feat.astype(jnp.float32)
    for i, W in enumerate(weights):
        Wb = W.astype(jnp.bfloat16)
        hs = (h * norm).astype(jnp.bfloat16)
        hb = h.astype(jnp.bfloat16)
        agg = jnp.dot(A.astype(jnp.bfloat16), hs, preferred_element_type=jnp.float32)
        mn = l2n(agg * norm).astype(jnp.bfloat16)
        t = -jnp.dot(mn, Wb, preferred_element_type=jnp.float32)
        skip = jnp.dot(hb, Wb, preferred_element_type=jnp.float32)
        h = l2n(t) + gamma * skip
        if i == len(weights) - 1:
            embed = h
    return h, embed


if __name__ == "__main__":
    # Small deterministic example consistent with GNN_high(in, hidden, out, num_lay).
    N = 300          # nodes -> padded to 384, grid (3, 3) with tm=tk=128
    IN_SIZE = 24
    HIDDEN = 48
    OUT_SIZE = 10
    NUM_LAY = 3
    GAMMA = 0.3

    key = jax.random.PRNGKey(0)
    k_feat, k_adj, k_w = jax.random.split(key, 3)

    feat = jax.random.normal(k_feat, (N, IN_SIZE), dtype=jnp.float32)
    # Random directed graph as dense adjacency A[dst, src].
    A = (jax.random.uniform(k_adj, (N, N)) < 0.05).astype(jnp.float32)

    # Linear weights (no bias), stored as (D_in, D_out) == PyTorch weight.T,
    # init U(-1/sqrt(fan_in), 1/sqrt(fan_in)) like nn.Linear's default.
    dims = [IN_SIZE] + [HIDDEN] * (NUM_LAY - 1) + [OUT_SIZE]
    wkeys = jax.random.split(k_w, NUM_LAY)
    weights = []
    for li in range(NUM_LAY):
        fan_in, fan_out = dims[li], dims[li + 1]
        bound = 1.0 / (fan_in ** 0.5)
        weights.append(
            jax.random.uniform(wkeys[li], (fan_in, fan_out),
                               minval=-bound, maxval=bound, dtype=jnp.float32))

    h, embed = gnn_high_forward(feat, A, weights, gamma=GAMMA, tm=128, tk=128)
    jax.block_until_ready(h)
    jax.block_until_ready(embed)

    h_bf, e_bf = _reference_forward_bf16(feat, A, weights, gamma=GAMMA)
    h_32, e_32 = _reference_forward_f32(feat, A, weights, gamma=GAMMA)

    assert h.shape == (N, OUT_SIZE) and embed.shape == (N, OUT_SIZE)
    # Tight check vs. a reference that quantizes bf16 at the same points as the kernel.
    assert jnp.allclose(h, h_bf, atol=1e-2, rtol=1e-2)
    assert jnp.allclose(embed, e_bf, atol=1e-2, rtol=1e-2)
    # Looser check vs. the full-f32 PyTorch-semantics reference (bf16 MXU inputs).
    assert jnp.allclose(h, h_32, atol=5e-2, rtol=5e-2)
    assert jnp.allclose(embed, e_32, atol=5e-2, rtol=5e-2)

    print("KERNEL_OK")
</pallas_src>

<mosaic_0001>
module attributes {stable_mosaic.version = 11 : i64} {
  func.func @_gnn_layer_kernel(%arg0: i32, %arg1: i32, %arg2: memref<128x128xi8, #tpu.memory_space<vmem>>, %arg3: memref<128x128xbf16, #tpu.memory_space<vmem>>, %arg4: memref<128x128xbf16, #tpu.memory_space<vmem>>, %arg5: memref<128x1xf32, #tpu.memory_space<vmem>>, %arg6: memref<128x128xbf16, #tpu.memory_space<vmem>>, %arg7: memref<128x128xf32, #tpu.memory_space<vmem>>, %arg8: memref<128x128xf32, #tpu.memory_space<vmem>>) attributes {dimension_semantics = [#tpu.dimension_semantics<parallel>, #tpu.dimension_semantics<arbitrary>], iteration_bounds = array<i64: 3, 3>, scalar_prefetch = 0 : i64, scratch_operands = 1 : i64, tpu.core_type = #tpu.core_type<tc>, window_params = [{transform_indices = @transform_0, window_bounds = array<i64: 128, 128>}, {transform_indices = @transform_1, window_bounds = array<i64: 128, 128>}, {transform_indices = @transform_2, window_bounds = array<i64: 128, 128>}, {transform_indices = @transform_3, window_bounds = array<i64: 128, 1>}, {pipeline_mode = #tpu.pipeline_mode<synchronous>, transform_indices = @transform_4, window_bounds = array<i64: 128, 128>}, {transform_indices = @transform_5, window_bounds = array<i64: 128, 128>}]} {
    %c0_i32 = arith.constant 0 : i32
    %0 = arith.cmpi eq, %arg1, %c0_i32 : i32
    %1 = arith.extui %0 : i1 to i32
    %c0_i32_0 = arith.constant 0 : i32
    %2 = arith.cmpi ne, %1, %c0_i32_0 : i32
    scf.if %2 {
      %cst_9 = arith.constant 0.000000e+00 : f32
      %13 = vector.broadcast %cst_9 : f32 to vector<128x128xf32>
      %c0_10 = arith.constant 0 : index
      %c0_11 = arith.constant 0 : index
      %14 = vector.load %arg8[%c0_10, %c0_11] : memref<128x128xf32, #tpu.memory_space<vmem>>, vector<128x128xf32>
      tpu.vector_store %arg8[%c0_10, %c0_11], %13 {strides = array<i32>} : memref<128x128xf32, #tpu.memory_space<vmem>>, vector<128x128xf32>,
    } else {
    }
    %c0 = arith.constant 0 : index
    %c0_1 = arith.constant 0 : index
    %3 = vector.load %arg2[%c0, %c0_1] : memref<128x128xi8, #tpu.memory_space<vmem>>, vector<128x128xi8>
    %4 = arith.sitofp %3 : vector<128x128xi8> to vector<128x128xbf16>
    %c0_2 = arith.constant 0 : index
    %c0_3 = arith.constant 0 : index
    %5 = vector.load %arg8[%c0_2, %c0_3] : memref<128x128xf32, #tpu.memory_space<vmem>>, vector<128x128xf32>
    %c0_4 = arith.constant 0 : index
    %c0_5 = arith.constant 0 : index
    %6 = vector.load %arg3[%c0_4, %c0_5] : memref<128x128xbf16, #tpu.memory_space<vmem>>, vector<128x128xbf16>
    %cst = arith.constant dense<0.000000e+00> : vector<128x128xf32>
    %7 = tpu.matmul %4, %6, %cst {dimension_numbers = #tpu.dot_dimension_numbers<[1], [0], [0], [1], [0, 0, 1, 1], [], []>} : vector<128x128xbf16>, vector<128x128xbf16>, vector<128x128xf32> -> vector<128x128xf32>
    %8 = arith.addf %5, %7 : vector<128x128xf32>
    %c0_6 = arith.constant 0 : index
    %c0_7 = arith.constant 0 : index
    %9 = vector.load %arg8[%c0_6, %c0_7] : memref<128x128xf32, #tpu.memory_space<vmem>>, vector<128x128xf32>
    tpu.vector_store %arg8[%c0_6, %c0_7], %8 {strides = array<i32>} : memref<128x128xf32, #tpu.memory_space<vmem>>, vector<128x128xf32>,
    %c2_i32 = arith.constant 2 : i32
    %10 = arith.cmpi eq, %arg1, %c2_i32 : i32
    %11 = arith.extui %10 : i1 to i32
    %c0_i32_8 = arith.constant 0 : i32
    %12 = arith.cmpi ne, %11, %c0_i32_8 : i32
    scf.if %12 {
      %c0_9 = arith.constant 0 : index
      %c0_10 = arith.constant 0 : index
      %13 = vector.load %arg5[%c0_9, %c0_10] : memref<128x1xf32, #tpu.memory_space<vmem>>, vector<128x1xf32>
      %c0_11 = arith.constant 0 : index
      %c0_12 = arith.constant 0 : index
      %14 = vector.load %arg8[%c0_11, %c0_12] : memref<128x128xf32, #tpu.memory_space<vmem>>, vector<128x128xf32>
      %15 = vector.broadcast %13 : vector<128x1xf32> to vector<128x128xf32>
      %16 = arith.mulf %14, %15 : vector<128x128xf32>
      %17 = arith.mulf %16, %16 : vector<128x128xf32>
      %cst_13 = arith.constant dense<0.000000e+00> : vector<128xf32>
      %18 = vector.multi_reduction <add>, %17, %cst_13 [1] : vector<128x128xf32> to vector<128xf32>
      %19 = vector.shape_cast %18 : vector<128xf32> to vector<128x1xf32>
      %cst_14 = arith.constant 1.000000e-24 : f32
      %20 = vector.broadcast %cst_14 : f32 to vector<128x1xf32>
      %21 = arith.maximumf %19, %20 : vector<128x1xf32>
      %22 = math.rsqrt %21 : vector<128x1xf32>
      %23 = vector.broadcast %22 : vector<128x1xf32> to vector<128x128xf32>
      %24 = arith.mulf %16, %23 : vector<128x128xf32>
      %25 = arith.truncf %24 : vector<128x128xf32> to vector<128x128xbf16>
      %c0_15 = arith.constant 0 : index
      %c0_16 = arith.constant 0 : index
      %26 = vector.load %arg4[%c0_15, %c0_16] : memref<128x128xbf16, #tpu.memory_space<vmem>>, vector<128x128xbf16>
      %27 = tpu.concatenate %25, %26 in 0 : vector<128x128xbf16>, vector<128x128xbf16> -> vector<256x128xbf16>
      %c0_17 = arith.constant 0 : index
      %c0_18 = arith.constant 0 : index
      %28 = vector.load %arg6[%c0_17, %c0_18] : memref<128x128xbf16, #tpu.memory_space<vmem>>, vector<128x128xbf16>
      %cst_19 = arith.constant dense<0.000000e+00> : vector<256x128xf32>
      %29 = tpu.matmul %27, %28, %cst_19 {dimension_numbers = #tpu.dot_dimension_numbers<[1], [0], [0], [1], [0, 0, 1, 1], [], []>} : vector<256x128xbf16>, vector<128x128xbf16>, vector<256x128xf32> -> vector<256x128xf32>
      %30 = vector.extract_strided_slice %29 {offsets = [0, 0], sizes = [128, 128], strides = [1, 1]} : vector<256x128xf32> to vector<128x128xf32>
      %cst_20 = arith.constant 0.000000e+00 : f32
      %31 = vector.broadcast %cst_20 : f32 to vector<128x128xf32>
      %32 = arith.subf %31, %30 : vector<128x128xf32>
      %33 = vector.extract_strided_slice %29 {offsets = [128, 0], sizes = [128, 128], strides = [1, 1]} : vector<256x128xf32> to vector<128x128xf32>
      %34 = arith.mulf %32, %32 : vector<128x128xf32>
      %cst_21 = arith.constant dense<0.000000e+00> : vector<128xf32>
      %35 = vector.multi_reduction <add>, %34, %cst_21 [1] : vector<128x128xf32> to vector<128xf32>
      %36 = vector.shape_cast %35 : vector<128xf32> to vector<128x1xf32>
      %cst_22 = arith.constant 1.000000e-24 : f32
      %37 = vector.broadcast %cst_22 : f32 to vector<128x1xf32>
      %38 = arith.maximumf %36, %37 : vector<128x1xf32>
      %39 = math.rsqrt %38 : vector<128x1xf32>
      %40 = vector.broadcast %39 : vector<128x1xf32> to vector<128x128xf32>
      %41 = arith.mulf %32, %40 : vector<128x128xf32>
      %cst_23 = arith.constant 3.000000e-01 : f32
      %42 = vector.broadcast %cst_23 : f32 to vector<128x128xf32>
      %43 = arith.mulf %42, %33 : vector<128x128xf32>
      %44 = arith.addf %41, %43 : vector<128x128xf32>
      %c0_24 = arith.constant 0 : index
      %c0_25 = arith.constant 0 : index
      %45 = vector.load %arg7[%c0_24, %c0_25] : memref<128x128xf32, #tpu.memory_space<vmem>>, vector<128x128xf32>
      tpu.vector_store %arg7[%c0_24, %c0_25], %44 {strides = array<i32>} : memref<128x128xf32, #tpu.memory_space<vmem>>, vector<128x128xf32>,
    } else {
    }
    return
  }
  func.func @transform_0(%arg0: i32, %arg1: i32) -> (i32, i32) {
    %c0_i32 = arith.constant 0 : i32
    return %arg0, %arg1 : i32, i32
  }
  func.func @transform_1(%arg0: i32, %arg1: i32) -> (i32, i32) {
    %c0_i32 = arith.constant 0 : i32
    %c0_i32_0 = arith.constant 0 : i32
    return %arg1, %c0_i32 : i32, i32
  }
  func.func @transform_2(%arg0: i32, %arg1: i32) -> (i32, i32) {
    %c0_i32 = arith.constant 0 : i32
    %c0_i32_0 = arith.constant 0 : i32
    return %arg0, %c0_i32 : i32, i32
  }
  func.func @transform_3(%arg0: i32, %arg1: i32) -> (i32, i32) {
    %c0_i32 = arith.constant 0 : i32
    %c0_i32_0 = arith.constant 0 : i32
    return %arg0, %c0_i32 : i32, i32
  }
  func.func @transform_4(%arg0: i32, %arg1: i32) -> (i32, i32) {
    %c0_i32 = arith.constant 0 : i32
    %c0_i32_0 = arith.constant 0 : i32
    %c0_i32_1 = arith.constant 0 : i32
    return %c0_i32, %c0_i32_0 : i32, i32
  }
  func.func @transform_5(%arg0: i32, %arg1: i32) -> (i32, i32) {
    %c0_i32 = arith.constant 0 : i32
    %c0_i32_0 = arith.constant 0 : i32
    return %arg0, %c0_i32 : i32, i32
  }
}

</mosaic_0001>

<llo_original>
// kernel: tpu_custom_call.1
$region0: #{tpu_custom_call.1}
  #allocation0 [shape = 'u32[]', space=smem, size = 0x4, offset = 0x4, fixed_abs, tag = 'smem constant byte address 0x4 - core index']
  #allocation1 [shape = 'u32[144,128]{1,0:T(1,128)}', space=vmem, size = 0x12000, scoped, tag = 'internal scratch']
  #allocation2 [shape = 'f32[128,128]{1,0:T(8,128)}', space=vmem, size = 0x10000, scoped, tag = 'scratch operand']
  %s0 = inlined_call_operand.vmem [shape: s8[384,384], index: 0, kind: input, shape index: {}]
  %s1 = inlined_call_operand.hbm [shape: bf16[384,128], index: 1, kind: input, shape index: {}]
  %s2 = inlined_call_operand.hbm [shape: bf16[384,128], index: 2, kind: input, shape index: {}]
  %s3 = inlined_call_operand.vmem [shape: f32[384,1], index: 3, kind: input, shape index: {}]
  %s4 = inlined_call_operand.vmem [shape: bf16[128,128], index: 4, kind: input, shape index: {}]
  %s5 = inlined_call_operand.hbm [shape: f32[384,128], index: 5, kind: output, shape index: {}]
  %s6 = sld [smem:[#allocation0]]
  $region107: #{tpu_custom_call.1} parent=0
    _
  %s8 = ssub.s32 1, %s6
  %s9 = scalar_select 0, %s8, %s6
  $region1: #{tpu_custom_call.1} parent=0
    #allocation3 [shape = 'u8[32768]{0}', space=vmem, size = 0x8000, scoped, tag = 'input window, operand 0']
    #allocation4 [shape = 'u8[65536]{0}', space=vmem, size = 0x10000, scoped, tag = 'input window, operand 1']
    #allocation5 [shape = 's32[2]{0}', space=sflag, size = 0x8, scoped, tag = 'scoped memory for tpu_custom_call.1']
    #allocation6 [shape = 's32[2]{0}', space=sflag, size = 0x8, scoped, tag = 'scoped memory for tpu_custom_call.1']
    #allocation7 [shape = 'u8[65536]{0}', space=vmem, size = 0x10000, scoped, tag = 'input window, operand 2']
    #allocation8 [shape = 's32[2]{0}', space=sflag, size = 0x8, scoped, tag = 'scoped memory for tpu_custom_call.1']
    #allocation9 [shape = 'u8[131072]{0}', space=vmem, size = 0x20000, scoped, tag = 'output window, operand 0']
    %10 = vsyncpa [#allocation5], 0
    %s11 = scalar_lea.sflag [#allocation5], 1
    %12 = vsyncpa %s11, 0
    %13 = vsyncpa [#allocation8], 0
    %s14 = scalar_lea.sflag [#allocation8], 1
    %15 = vsyncpa %s14, 0
    %16 = vsyncpa [#allocation6], 0
    %s17 = scalar_lea.sflag [#allocation6], 1
    %18 = vsyncpa %s17, 0
    loop: start=0, step=1, limit=11
    $region2: #{tpu_custom_call.1} parent=1 // loop_pre_header
      _
    $region3: #{tpu_custom_call.1} parent=1 // loop_header
      %s20 = sphi 0, %s24
      %p21 = scmp.ge.s32.totalorder %s20, 11
      %s27 = sphi 0, %s39
      %s28 = sphi 0, %s35
      %s29 = sphi 0, %s27
      %s30 = sphi 0, %s28
      %s31 = sphi 0, %s29
      %s32 = sphi 0, %s30
      %s44 = sphi 0, %s46
      %s47 = sphi 0, %s44
      %s48 = sphi 0, %s47
      %s64 = sphi 0, %s48
      %s70 = sphi 0, %s72
      %s73 = sphi 0, %s70
      %s74 = sphi 0, %s73
      %s90 = sphi 0, %s74
      %s96 = sphi 0, %s98
      %s99 = sphi 0, %s96
      %s100 = sphi 0, %s99
      %s116 = sphi 0, %s100
      %s122 = sphi 0, %s124
      %s125 = sphi 0, %s122
      %s126 = sphi 0, %s125
      %s142 = sphi 0, %s126
      %s146 = sphi 0, %s146
      %s148 = sphi 0, %s146
      %s149 = sphi 0, %s148
      %s163 = sphi 0, %s149
      %s169 = sphi 0, %s171
      %s172 = sphi 0, %s169
      %s173 = sphi 0, %s172
      %s189 = sphi 0, %s173
    $region4: #{tpu_custom_call.1} parent=1 // loop_header_branch
      %23 = sbr.rel (%p21) target = $region8
    $region5: #{tpu_custom_call.1} parent=1 // loop_body
      %s25 = ssub.s32 %s20, 1
      %s26 = ssub.s32 %s20, 2
      %s33 = sadd.s32 1, %s28
      %p34 = scmp.ge.s32.totalorder %s33, 3
      %s35 = scalar_select %p34, 0, %s33
      %s36 = sadd.s32 1, %s27
      %s37 = scalar_select %p34, %s36, %s27
      %p38 = scmp.ge.s32.totalorder %s37, 3
      %s39 = scalar_select %p38, 0, %s37
      %s40 = ssub.s32 %s27, %s39
      %s41 = ssub.s32 %s28, %s35
      %s42 = sor.u32 %s40, %s41
      %p43 = scmp.eq.s32.totalorder %s42, 0
      %s45 = sadd.s32 %s44, 1
      %s46 = scalar_select %p43, %s44, %s45
      %p49 = pneg %p43
      %p50 = scmp.eq.s32.totalorder %s20, 8
      %p51 = por %p49, %p50
      %p52 = scmp.ne.s32.totalorder %s44, %s47
      %p53 = scmp.eq.s32.totalorder %s20, 0
      %p54 = por %p52, %p53
      %p55 = scmp.ne.s32.totalorder %s44, %s47
      %p56 = scmp.eq.s32.totalorder %s25, 8
      %p57 = por %p55, %p56
      %p58 = scmp.ne.s32.totalorder %s47, %s48
      %p59 = scmp.eq.s32.totalorder %s25, 0
      %p60 = por %p58, %p59
      %p61 = scmp.ne.s32.totalorder %s47, %s48
      %p62 = scmp.eq.s32.totalorder %s26, 8
      %p63 = por %p61, %p62
      %p65 = scmp.ne.s32.totalorder %s48, %s64
      %p66 = scmp.eq.s32.totalorder %s26, 0
      %p67 = por %p65, %p66
      %s68 = ssub.s32 %s28, %s35
      %p69 = scmp.eq.s32.totalorder %s68, 0
      %s71 = sadd.s32 %s70, 1
      %s72 = scalar_select %p69, %s70, %s71
      %p75 = pneg %p69
      %p76 = scmp.eq.s32.totalorder %s20, 8
      %p77 = por %p75, %p76
      %p78 = scmp.ne.s32.totalorder %s70, %s73
      %p79 = scmp.eq.s32.totalorder %s20, 0
      %p80 = por %p78, %p79
      %p81 = scmp.ne.s32.totalorder %s70, %s73
      %p82 = scmp.eq.s32.totalorder %s25, 8
      %p83 = por %p81, %p82
      %p84 = scmp.ne.s32.totalorder %s73, %s74
      %p85 = scmp.eq.s32.totalorder %s25, 0
      %p86 = por %p84, %p85
      %p87 = scmp.ne.s32.totalorder %s73, %s74
      %p88 = scmp.eq.s32.totalorder %s26, 8
      %p89 = por %p87, %p88
      %p91 = scmp.ne.s32.totalorder %s74, %s90
      %p92 = scmp.eq.s32.totalorder %s26, 0
      %p93 = por %p91, %p92
      %s94 = ssub.s32 %s27, %s39
      %p95 = scmp.eq.s32.totalorder %s94, 0
      %s97 = sadd.s32 %s96, 1
      %s98 = scalar_select %p95, %s96, %s97
      %p101 = pneg %p95
      %p102 = scmp.eq.s32.totalorder %s20, 8
      %p103 = por %p101, %p102
      %p104 = scmp.ne.s32.totalorder %s96, %s99
      %p105 = scmp.eq.s32.totalorder %s20, 0
      %p106 = por %p104, %p105
      %p107 = scmp.ne.s32.totalorder %s96, %s99
      %p108 = scmp.eq.s32.totalorder %s25, 8
      %p109 = por %p107, %p108
      %p110 = scmp.ne.s32.totalorder %s99, %s100
      %p111 = scmp.eq.s32.totalorder %s25, 0
      %p112 = por %p110, %p111
      %p113 = scmp.ne.s32.totalorder %s99, %s100
      %p114 = scmp.eq.s32.totalorder %s26, 8
      %p115 = por %p113, %p114
      %p117 = scmp.ne.s32.totalorder %s100, %s116
      %p118 = scmp.eq.s32.totalorder %s26, 0
      %p119 = por %p117, %p118
      %s120 = ssub.s32 %s27, %s39
      %p121 = scmp.eq.s32.totalorder %s120, 0
      %s123 = sadd.s32 %s122, 1
      %s124 = scalar_select %p121, %s122, %s123
      %p127 = pneg %p121
      %p128 = scmp.eq.s32.totalorder %s20, 8
      %p129 = por %p127, %p128
      %p130 = scmp.ne.s32.totalorder %s122, %s125
      %p131 = scmp.eq.s32.totalorder %s20, 0
      %p132 = por %p130, %p131
      %p133 = scmp.ne.s32.totalorder %s122, %s125
      %p134 = scmp.eq.s32.totalorder %s25, 8
      %p135 = por %p133, %p134
      %p136 = scmp.ne.s32.totalorder %s125, %s126
      %p137 = scmp.eq.s32.totalorder %s25, 0
      %p138 = por %p136, %p137
      %p139 = scmp.ne.s32.totalorder %s125, %s126
      %p140 = scmp.eq.s32.totalorder %s26, 8
      %p141 = por %p139, %p140
      %p143 = scmp.ne.s32.totalorder %s126, %s142
      %p144 = scmp.eq.s32.totalorder %s26, 0
      %p145 = por %p143, %p144
      %s147 = sadd.s32 %s146, 1
      %p150 = scmp.eq.s32.totalorder %s20, 8
      %p151 = scmp.ne.s32.totalorder %s146, %s148
      %p152 = scmp.eq.s32.totalorder %s20, 0
      %p153 = por %p151, %p152
      %p154 = scmp.ne.s32.totalorder %s146, %s148
      %p155 = scmp.eq.s32.totalorder %s25, 8
      %p156 = por %p154, %p155
      %p157 = scmp.ne.s32.totalorder %s148, %s149
      %p158 = scmp.eq.s32.totalorder %s25, 0
      %p159 = por %p157, %p158
      %p160 = scmp.ne.s32.totalorder %s148, %s149
      %p161 = scmp.eq.s32.totalorder %s26, 8
      %p162 = por %p160, %p161
      %p164 = scmp.ne.s32.totalorder %s149, %s163
      %p165 = scmp.eq.s32.totalorder %s26, 0
      %p166 = por %p164, %p165
      %s167 = ssub.s32 %s27, %s39
      %p168 = scmp.eq.s32.totalorder %s167, 0
      %s170 = sadd.s32 %s169, 1
      %s171 = scalar_select %p168, %s169, %s170
      %p174 = pneg %p168
      %p175 = scmp.eq.s32.totalorder %s20, 8
      %p176 = por %p174, %p175
      %p177 = scmp.ne.s32.totalorder %s169, %s172
      %p178 = scmp.eq.s32.totalorder %s20, 0
      %p179 = por %p177, %p178
      %p180 = scmp.ne.s32.totalorder %s169, %s172
      %p181 = scmp.eq.s32.totalorder %s25, 8
      %p182 = por %p180, %p181
      %p183 = scmp.ne.s32.totalorder %s172, %s173
      %p184 = scmp.eq.s32.totalorder %s25, 0
      %p185 = por %p183, %p184
      %p186 = scmp.ne.s32.totalorder %s172, %s173
      %p187 = scmp.eq.s32.totalorder %s26, 8
      %p188 = por %p186, %p187
      %p190 = scmp.ne.s32.totalorder %s173, %s189
      %p191 = scmp.eq.s32.totalorder %s26, 0
      %p192 = por %p190, %p191
      %p193 = scmp.le.s32.totalorder 1, %s20
      %p194 = scmp.lt.s32.totalorder %s20, 10
      %p195 = pnand %p193, %p194
      %p196 = pneg %p195
      // Predicated region
      $region9: #{tpu_custom_call.1} parent=5 // pred_check
        _
      $region10: #{tpu_custom_call.1} parent=5 // pred_check_branch
        %198 = sbr.rel (%p195) target = $region12
      $region11: #{tpu_custom_call.1} parent=5 // pred_region
        %s199 = ssub.s32 %s20, 1
        // Predicated region
        $region13: #{tpu_custom_call.1} parent=11 // pred_check
          %p200 = pneg %p159
        $region14: #{tpu_custom_call.1} parent=11 // pred_check_branch
          %202 = sbr.rel (%p200) target = $region16
        $region15: #{tpu_custom_call.1} parent=11 // pred_region
          _
        $region16: #{tpu_custom_call.1} parent=11 // pred_fallthru
          _
      $region12: #{tpu_custom_call.1} parent=5 // pred_fallthru
        _
      %p203 = scmp.lt.s32.totalorder %s20, 9
      // Predicated region
      $region17: #{tpu_custom_call.1} parent=5 // pred_check
        %p204 = pneg %p203
      $region18: #{tpu_custom_call.1} parent=5 // pred_check_branch
        %206 = sbr.rel (%p204) target = $region20
      $region19: #{tpu_custom_call.1} parent=5 // pred_region
        // Predicated region
        $region21: #{tpu_custom_call.1} parent=19 // pred_check
          %p207 = pneg %p54
        $region22: #{tpu_custom_call.1} parent=19 // pred_check_branch
          %209 = sbr.rel (%p207) target = $region24
        $region23: #{tpu_custom_call.1} parent=19 // pred_region
          %s210 = sand.u32 %s44, 1
          %s211 = sand.u32 %s44, 1
          %s212 = smul.addr %s211, 32
          %s213 = scalar_lea.vmem [#allocation3], %s212
          %s214 = smul.u32 4, %s27
          %s215 = smul.addr %s214, 3
          %s216 = sadd.s32 %s28, %s215
          %s217 = smul.addr %s216, 8
          %s218 = scalar_lea.vmem %s0, %s217
          // Predicated region
          $region25: #{tpu_custom_call.1} parent=23 // pred_check
            _
          $region26: #{tpu_custom_call.1} parent=23 // pred_check_branch
            %220 = sbr.rel (0) target = $region28
          $region27: #{tpu_custom_call.1} parent=23 // pred_region
            // Predicated region
            $region29: #{tpu_custom_call.1} parent=27 // pred_check
              _
            $region30: #{tpu_custom_call.1} parent=27 // pred_check_branch
              %222 = sbr.rel (0) target = $region32
            $region31: #{tpu_custom_call.1} parent=27 // pred_region
              // Predicated region
              $region44: #{tpu_custom_call.1} parent=31 // pred_check
                _
              $region45: #{tpu_custom_call.1} parent=31 // pred_check_branch
                %243 = sbr.rel (0) target = $region47
              $region46: #{tpu_custom_call.1} parent=31 // pred_region
                loop: start=0, step=1, limit=1
                $region48: #{tpu_custom_call.1} parent=46 // loop_pre_header
                  _
                $region49: #{tpu_custom_call.1} parent=46 // loop_header
                  %s245 = sphi 0, %s249
                  %p246 = scmp.ge.s32.totalorder %s245, 1
                  %s250 = sphi %s218, %s218
                  %s251 = sphi %s213, %s213
                $region50: #{tpu_custom_call.1} parent=46 // loop_header_branch
                  %248 = sbr.rel (%p246) target = $region54
                $region51: #{tpu_custom_call.1} parent=46 // loop_body
                  %v252 = vld [vmem:[%s250] sm:$0xff]
                  %253 = vst [vmem:[%s251] sm:$0xff] %v252
                  %v254 = vld [vmem:[%s250 + $0x18] sm:$0xff]
                  %255 = vst [vmem:[%s251 + $0x8] sm:$0xff] %v254
                  %v256 = vld [vmem:[%s250 + $0x30] sm:$0xff]
                  %257 = vst [vmem:[%s251 + $0x10] sm:$0xff] %v256
                  %v258 = vld [vmem:[%s250 + $0x48] sm:$0xff]
                  %259 = vst [vmem:[%s251 + $0x18] sm:$0xff] %v258
                $region52: #{tpu_custom_call.1} parent=46 // loop_footer
                  %s249 = sadd.s32 1, %s245
                $region53: #{tpu_custom_call.1} parent=46 // loop_footer_branch
                  %244 = sbr.rel target = $region49
                $region54: #{tpu_custom_call.1} parent=46 // loop_exit
                  _
              $region47: #{tpu_custom_call.1} parent=31 // pred_fallthru
                _
              // Predicated region
              $region55: #{tpu_custom_call.1} parent=31 // pred_check
                _
              $region56: #{tpu_custom_call.1} parent=31 // pred_check_branch
                %261 = sbr.rel target = $region58
              $region57: #{tpu_custom_call.1} parent=31 // pred_region
                _
              $region58: #{tpu_custom_call.1} parent=31 // pred_fallthru
                _
            $region32: #{tpu_custom_call.1} parent=27 // pred_fallthru
              _
            // Predicated region
            $region33: #{tpu_custom_call.1} parent=27 // pred_check
              _
            $region34: #{tpu_custom_call.1} parent=27 // pred_check_branch
              %224 = sbr.rel target = $region36
            $region35: #{tpu_custom_call.1} parent=27 // pred_region
              loop: start=0, step=1, limit=1
              $region37: #{tpu_custom_call.1} parent=35 // loop_pre_header
                _
              $region38: #{tpu_custom_call.1} parent=35 // loop_header
                %s227 = sphi 0, %s231
                %p228 = scmp.ge.s32.totalorder %s227, 1
                %s232 = sphi %s218, %s218
                %s233 = sphi %s213, %s213
              $region39: #{tpu_custom_call.1} parent=35 // loop_header_branch
                %230 = sbr.rel (%p228) target = $region43
              $region40: #{tpu_custom_call.1} parent=35 // loop_body
                %v234 = vld [vmem:[%s232] sm:$0xff]
                %235 = vst [vmem:[%s233] sm:$0xff] %v234
                %v236 = vld [vmem:[%s232 + $0x18] sm:$0xff]
                %237 = vst [vmem:[%s233 + $0x8] sm:$0xff] %v236
                %v238 = vld [vmem:[%s232 + $0x30] sm:$0xff]
                %239 = vst [vmem:[%s233 + $0x10] sm:$0xff] %v238
                %v240 = vld [vmem:[%s232 + $0x48] sm:$0xff]
                %241 = vst [vmem:[%s233 + $0x18] sm:$0xff] %v240
              $region41: #{tpu_custom_call.1} parent=35 // loop_footer
                %s231 = sadd.s32 1, %s227
              $region42: #{tpu_custom_call.1} parent=35 // loop_footer_branch
                %226 = sbr.rel target = $region38
              $region43: #{tpu_custom_call.1} parent=35 // loop_exit
                _
            $region36: #{tpu_custom_call.1} parent=27 // pred_fallthru
              _
          $region28: #{tpu_custom_call.1} parent=23 // pred_fallthru
            _
          %262 = vnop
        $region24: #{tpu_custom_call.1} parent=19 // pred_fallthru
          _
        // Predicated region
        $region59: #{tpu_custom_call.1} parent=19 // pred_check
          %p263 = pneg %p80
        $region60: #{tpu_custom_call.1} parent=19 // pred_check_branch
          %265 = sbr.rel (%p263) target = $region62
        $region61: #{tpu_custom_call.1} parent=19 // pred_region
          %s266 = sand.u32 %s70, 1
          %s267 = scalar_lea.sflag [#allocation5], %s266
          %s268 = sand.u32 %s70, 1
          %s269 = smul.addr %s268, 64
          %s270 = scalar_lea.vmem [#allocation4], %s269
          %s271 = smul.u32 16, %s28
          %s273 = ssub.s32 1024, 1024
          %274 = vsyncadd %s267, %s273
          %s275 = smul.addr %s271, 64
          %s276 = scalar_lea.hbm %s1, %s275
          %s277 = sshll.u32 %s270, 4
          %s278 = int_to_ptr.vmem [resolvable:$true] %s277
          %283 = dma.hbm_to_vmem [thread:$0]  %s276, 1024, %s278, %s267, 64, 64, 4
        $region62: #{tpu_custom_call.1} parent=19 // pred_fallthru
          _
        // Predicated region
        $region63: #{tpu_custom_call.1} parent=19 // pred_check
          %p284 = pneg %p106
        $region64: #{tpu_custom_call.1} parent=19 // pred_check_branch
          %286 = sbr.rel (%p284) target = $region66
        $region65: #{tpu_custom_call.1} parent=19 // pred_region
          %s287 = sand.u32 %s96, 1
          %s288 = scalar_lea.sflag [#allocation8], %s287
          %s289 = sand.u32 %s96, 1
          %s290 = smul.addr %s289, 64
          %s291 = scalar_lea.vmem [#allocation7], %s290
          %s292 = smul.u32 16, %s27
          %s294 = ssub.s32 1024, 1024
          %295 = vsyncadd %s288, %s294
          %s296 = smul.addr %s292, 64
          %s297 = scalar_lea.hbm %s2, %s296
          %s298 = sshll.u32 %s291, 4
          %s299 = int_to_ptr.vmem [resolvable:$true] %s298
          %304 = dma.hbm_to_vmem [thread:$0]  %s297, 1024, %s299, %s288, 64, 64, 4
        $region66: #{tpu_custom_call.1} parent=19 // pred_fallthru
          _
        // Predicated region
        $region67: #{tpu_custom_call.1} parent=19 // pred_check
          %p305 = pneg %p132
        $region68: #{tpu_custom_call.1} parent=19 // pred_check_branch
          %307 = sbr.rel (%p305) target = $region70
        $region69: #{tpu_custom_call.1} parent=19 // pred_region
          %s308 = smul.u32 16, %s27
          %p309 = scmp.lt.s32.totalorder %s308, 47
          %s310 = scalar_select %p309, %s308, 47
          %s311 = smul.addr %s310, 8
          %s312 = scalar_lea.vmem %s3, %s311
          %s313 = smul.u32 16, %s27
        $region70: #{tpu_custom_call.1} parent=19 // pred_fallthru
          _
      $region20: #{tpu_custom_call.1} parent=5 // pred_fallthru
        _
      %p314 = scmp.le.s32.totalorder 1, %s20
      %p315 = scmp.lt.s32.totalorder %s20, 10
      %p316 = pnand %p314, %p315
      %p317 = pneg %p316
      // Predicated region
      $region71: #{tpu_custom_call.1} parent=5 // pred_check
        _
      $region72: #{tpu_custom_call.1} parent=5 // pred_check_branch
        %319 = sbr.rel (%p316) target = $region74
      $region73: #{tpu_custom_call.1} parent=5 // pred_region
        %s320 = ssub.s32 %s20, 1
        %s321 = sand.u32 %s47, 1
        %s322 = sand.u32 %s47, 1
        %s323 = smul.addr %s322, 32
        %s324 = scalar_lea.vmem [#allocation3], %s323
        // Predicated region
        $region75: #{tpu_custom_call.1} parent=73 // pred_check
          %p325 = pneg %p60
        $region76: #{tpu_custom_call.1} parent=73 // pred_check_branch
          %327 = sbr.rel (%p325) target = $region78
        $region77: #{tpu_custom_call.1} parent=73 // pred_region
          _
        $region78: #{tpu_custom_call.1} parent=73 // pred_fallthru
          _
        %s328 = sand.u32 %s73, 1
        %s329 = scalar_lea.sflag [#allocation5], %s328
        %s330 = sand.u32 %s73, 1
        %s331 = smul.addr %s330, 64
        %s332 = scalar_lea.vmem [#allocation4], %s331
        // Predicated region
        $region79: #{tpu_custom_call.1} parent=73 // pred_check
          %p333 = pneg %p86
        $region80: #{tpu_custom_call.1} parent=73 // pred_check_branch
          %335 = sbr.rel (%p333) target = $region82
        $region81: #{tpu_custom_call.1} parent=73 // pred_region
          %336 = dma.done %s329, 1024
        $region82: #{tpu_custom_call.1} parent=73 // pred_fallthru
          _
        %s337 = sand.u32 %s99, 1
        %s338 = scalar_lea.sflag [#allocation8], %s337
        %s339 = sand.u32 %s99, 1
        %s340 = smul.addr %s339, 64
        %s341 = scalar_lea.vmem [#allocation7], %s340
        // Predicated region
        $region83: #{tpu_custom_call.1} parent=73 // pred_check
          %p342 = pneg %p112
        $region84: #{tpu_custom_call.1} parent=73 // pred_check_branch
          %344 = sbr.rel (%p342) target = $region86
        $region85: #{tpu_custom_call.1} parent=73 // pred_region
          %345 = dma.done %s338, 1024
        $region86: #{tpu_custom_call.1} parent=73 // pred_fallthru
          _
        %s346 = sand.u32 %s47, 1
        %s347 = sand.u32 %s47, 1
        %s348 = smul.addr %s347, 32
        %s349 = scalar_lea.vmem [#allocation3], %s348
        %p350 = pneg %p60
        %p351 = pneg %p57
        %s352 = sand.u32 %s73, 1
        %s353 = scalar_lea.sflag [#allocation5], %s352
        %s354 = sand.u32 %s73, 1
        %s355 = smul.addr %s354, 64
        %s356 = scalar_lea.vmem [#allocation4], %s355
        %p357 = pneg %p86
        %p358 = pneg %p83
        %s359 = sand.u32 %s99, 1
        %s360 = scalar_lea.sflag [#allocation8], %s359
        %s361 = sand.u32 %s99, 1
        %s362 = smul.addr %s361, 64
        %s363 = scalar_lea.vmem [#allocation7], %s362
        %p364 = pneg %p112
        %p365 = pneg %p109
        %s366 = smul.u32 16, %s29
        %p367 = scmp.lt.s32.totalorder %s366, 47
        %s368 = scalar_select %p367, %s366, 47
        %s369 = smul.addr %s368, 8
        %s370 = scalar_lea.vmem %s3, %s369
        %p371 = pneg %p138
        %p372 = pneg %p135
        %p373 = pneg %p159
        %p374 = pneg %p156
        %p375 = pneg %p185
        %p376 = pneg %p182
        %s377 = sand.u32 %s172, 1
        %s378 = scalar_lea.sflag [#allocation6], %s377
        %s379 = sand.u32 %s172, 1
        %s380 = smul.addr %s379, 128
        %s381 = scalar_lea.vmem [#allocation9], %s380
        %s382 = smul.u32 4, %s29
        %s383 = smul.u32 16, %s30
        %s384 = smul.u32 16, %s29
        %s385 = smul.u32 16, %s29
        %p386 = scmp.lt.s32.totalorder %s385, 47
        %s387 = scalar_select %p386, %s385, 47
        %s388 = smul.addr %s387, 8
        %s389 = scalar_lea.vmem %s3, %s388
        %s390 = smul.u32 16, %s29
        %s391 = smul.u32 16, %s29
        %p393 = scmp.eq.s32.totalorder %s30, 0
        // Predicated region
        $region87: #{tpu_custom_call.1} parent=73 // pred_check
          %p394 = pneg %p393
        $region88: #{tpu_custom_call.1} parent=73 // pred_check_branch
          %396 = sbr.rel (%p394) target = $region90
        $region89: #{tpu_custom_call.1} parent=73 // pred_region
          %397 = vst [vmem:[#allocation2] sm:$0xff] 0.0
          %398 = vst [vmem:[#allocation2 + $0x8] sm:$0xff] 0.0
          %399 = vst [vmem:[#allocation2 + $0x10] sm:$0xff] 0.0
          %400 = vst [vmem:[#allocation2 + $0x18] sm:$0xff] 0.0
          %401 = vst [vmem:[#allocation2 + $0x20] sm:$0xff] 0.0
          %402 = vst [vmem:[#allocation2 + $0x28] sm:$0xff] 0.0
          %403 = vst [vmem:[#allocation2 + $0x30] sm:$0xff] 0.0
          %404 = vst [vmem:[#allocation2 + $0x38] sm:$0xff] 0.0
          %405 = vst [vmem:[#allocation2 + $0x40] sm:$0xff] 0.0
          %406 = vst [vmem:[#allocation2 + $0x48] sm:$0xff] 0.0
          %407 = vst [vmem:[#allocation2 + $0x50] sm:$0xff] 0.0
          %408 = vst [vmem:[#allocation2 + $0x58] sm:$0xff] 0.0
          %409 = vst [vmem:[#allocation2 + $0x60] sm:$0xff] 0.0
          %410 = vst [vmem:[#allocation2 + $0x68] sm:$0xff] 0.0
          %411 = vst [vmem:[#allocation2 + $0x70] sm:$0xff] 0.0
          %412 = vst [vmem:[#allocation2 + $0x78] sm:$0xff] 0.0
        $region90: #{tpu_custom_call.1} parent=73 // pred_fallthru
          _
        %v413 = vld [vmem:[%s324] sm:$0xff]
        %v414 = vld [vmem:[%s324 + $0x8] sm:$0xff]
        %v415 = vld [vmem:[%s324 + $0x10] sm:$0xff]
        %v416 = vld [vmem:[%s324 + $0x18] sm:$0xff]
        %v417 = vunpack.c.l.s8.bf16 %v413
        %v418 = vunpack.c.h.s8.bf16 %v413
        %v419 = vunpack.c.l.s8.bf16 %v414
        %v420 = vunpack.c.h.s8.bf16 %v414
        %v421 = vunpack.c.l.s8.bf16 %v415
        %v422 = vunpack.c.h.s8.bf16 %v415
        %v423 = vunpack.c.l.s8.bf16 %v416
        %v424 = vunpack.c.h.s8.bf16 %v416
        %v425 = vld [vmem:[#allocation2] sm:$0xff]
        %v426 = vld [vmem:[#allocation2 + $0x8] sm:$0xff]
        %v427 = vld [vmem:[#allocation2 + $0x10] sm:$0xff]
        %v428 = vld [vmem:[#allocation2 + $0x18] sm:$0xff]
        %v429 = vld [vmem:[#allocation2 + $0x20] sm:$0xff]
        %v430 = vld [vmem:[#allocation2 + $0x28] sm:$0xff]
        %v431 = vld [vmem:[#allocation2 + $0x30] sm:$0xff]
        %v432 = vld [vmem:[#allocation2 + $0x38] sm:$0xff]
        %v433 = vld [vmem:[#allocation2 + $0x40] sm:$0xff]
        %v434 = vld [vmem:[#allocation2 + $0x48] sm:$0xff]
        %v435 = vld [vmem:[#allocation2 + $0x50] sm:$0xff]
        %v436 = vld [vmem:[#allocation2 + $0x58] sm:$0xff]
        %v437 = vld [vmem:[#allocation2 + $0x60] sm:$0xff]
        %v438 = vld [vmem:[#allocation2 + $0x68] sm:$0xff]
        %v439 = vld [vmem:[#allocation2 + $0x70] sm:$0xff]
        %v440 = vld [vmem:[#allocation2 + $0x78] sm:$0xff]
        %v441 = vld [vmem:[%s332] sm:$0xf]
        %v442 = vld [vmem:[%s332 + $0x4] sm:$0xf]
        %v443 = vld [vmem:[%s332 + $0x8] sm:$0xf]
        %v444 = vld [vmem:[%s332 + $0xc] sm:$0xf]
        %v445 = vld [vmem:[%s332 + $0x10] sm:$0xf]
        %v446 = vld [vmem:[%s332 + $0x14] sm:$0xf]
        %v447 = vld [vmem:[%s332 + $0x18] sm:$0xf]
        %v448 = vld [vmem:[%s332 + $0x1c] sm:$0xf]
        %v449 = vld [vmem:[%s332 + $0x20] sm:$0xf]
        %v450 = vld [vmem:[%s332 + $0x24] sm:$0xf]
        %v451 = vld [vmem:[%s332 + $0x28] sm:$0xf]
        %v452 = vld [vmem:[%s332 + $0x2c] sm:$0xf]
        %v453 = vld [vmem:[%s332 + $0x30] sm:$0xf]
        %v454 = vld [vmem:[%s332 + $0x34] sm:$0xf]
        %v455 = vld [vmem:[%s332 + $0x38] sm:$0xf]
        %v456 = vld [vmem:[%s332 + $0x3c] sm:$0xf]
        %v473 = vunpack.c.l.b16 %v441
        %v474 = vunpack.c.l.b16 %v442
        %v475 = vunpack.c.l.b16 %v443
        %v476 = vunpack.c.l.b16 %v444
        %v477 = vunpack.c.l.b16 %v445
        %v478 = vunpack.c.l.b16 %v446
        %v479 = vunpack.c.l.b16 %v447
        %v480 = vunpack.c.l.b16 %v448
        %v481 = vunpack.c.l.b16 %v449
        %v482 = vunpack.c.l.b16 %v450
        %v483 = vunpack.c.l.b16 %v451
        %v484 = vunpack.c.l.b16 %v452
        %v485 = vunpack.c.l.b16 %v453
        %v486 = vunpack.c.l.b16 %v454
        %v487 = vunpack.c.l.b16 %v455
        %v488 = vunpack.c.l.b16 %v456
        %v489 = vpack.c.b16 %v474, %v473
        %v490 = vpack.c.b16 %v476, %v475
        %v491 = vpack.c.b16 %v478, %v477
        %v492 = vpack.c.b16 %v480, %v479
        %v493 = vpack.c.b16 %v482, %v481
        %v494 = vpack.c.b16 %v484, %v483
        %v495 = vpack.c.b16 %v486, %v485
        %v496 = vpack.c.b16 %v488, %v487
        %505 = vmatprep.subr.bf16.mxu0 0
        %506 = vmatpush1.bf16.msra.mxu0 %v489
        %507 = vmatprep.subr.bf16.mxu0 0
        %508 = vmatpush1.bf16.msra.mxu0 %v490
        %509 = vmatprep.subr.bf16.mxu0 0
        %510 = vmatpush1.bf16.msra.mxu0 %v491
        %511 = vmatprep.subr.bf16.mxu0 0
        %512 = vmatpush1.bf16.msra.mxu0 %v492
        %513 = vmatprep.subr.bf16.mxu0 0
        %514 = vmatpush1.bf16.msra.mxu0 %v493
        %515 = vmatprep.subr.bf16.mxu0 0
        %516 = vmatpush1.bf16.msra.mxu0 %v494
        %517 = vmatprep.subr.bf16.mxu0 0
        %518 = vmatpush1.bf16.msra.mxu0 %v495
        %519 = vmatprep.subr.bf16.mxu0 0
        %520 = vmatpush1.bf16.msra.mxu0 %v496
        %521 = vmatprep.subr.bf16.mxu0 0
        %522 = vmatpush1.bf16.msra.mxu0 0
        %523 = vmatprep.subr.bf16.mxu0 0
        %524 = vmatpush1.bf16.msra.mxu0 0
        %525 = vmatprep.subr.bf16.mxu0 0
        %526 = vmatpush1.bf16.msra.mxu0 0
        %527 = vmatprep.subr.bf16.mxu0 0
        %528 = vmatpush1.bf16.msra.mxu0 0
        %529 = vmatprep.subr.bf16.mxu0 0
        %530 = vmatpush1.bf16.msra.mxu0 0
        %531 = vmatprep.subr.bf16.mxu0 0
        %532 = vmatpush1.bf16.msra.mxu0 0
        %533 = vmatprep.subr.bf16.mxu0 0
        %534 = vmatpush1.bf16.msra.mxu0 0
        %535 = vmatprep.subr.bf16.mxu0 0
        %536 = vmatpush1.bf16.msra.mxu0 0
        %537 = vmatprep.mubr.bf16.mxu0 0
        %538 = vmatmul.mubr.bf16.gmra.mrb[0].mxu0 %v417
        %v539 = vpop.f32.mrb[0].mxu0
        %v540 = vadd.f32 0.0, %v539
        %v541 = vpop.f32.mrb[0].mxu0
        %v542 = vpop.f32.mrb[0].mxu0
        %v543 = vadd.f32 0.0, %v542
        %v544 = vpop.f32.mrb[0].mxu0
        %545 = vmatprep.mubr.bf16.mxu0 0
        %546 = vmatmul.mubr.bf16.gmra.mrb[0].mxu0 %v418
        %v547 = vpop.f32.mrb[0].mxu0
        %v548 = vadd.f32 0.0, %v547
        %v549 = vpop.f32.mrb[0].mxu0
        %v550 = vpop.f32.mrb[0].mxu0
        %v551 = vadd.f32 0.0, %v550
        %v552 = vpop.f32.mrb[0].mxu0
        %553 = vmatprep.mubr.bf16.mxu0 0
        %554 = vmatmul.mubr.bf16.gmra.mrb[0].mxu0 %v419
        %v555 = vpop.f32.mrb[0].mxu0
        %v556 = vadd.f32 0.0, %v555
        %v557 = vpop.f32.mrb[0].mxu0
        %v558 = vpop.f32.mrb[0].mxu0
        %v559 = vadd.f32 0.0, %v558
        %v560 = vpop.f32.mrb[0].mxu0
        %561 = vmatprep.mubr.bf16.mxu0 0
        %562 = vmatmul.mubr.bf16.gmra.mrb[0].mxu0 %v420
        %v563 = vpop.f32.mrb[0].mxu0
        %v564 = vadd.f32 0.0, %v563
        %v565 = vpop.f32.mrb[0].mxu0
        %v566 = vpop.f32.mrb[0].mxu0
        %v567 = vadd.f32 0.0, %v566
        %v568 = vpop.f32.mrb[0].mxu0
        %569 = vmatprep.mubr.bf16.mxu0 0
        %570 = vmatmul.mubr.bf16.gmra.mrb[0].mxu0 %v421
        %v571 = vpop.f32.mrb[0].mxu0
        %v572 = vadd.f32 0.0, %v571
        %v573 = vpop.f32.mrb[0].mxu0
        %v574 = vpop.f32.mrb[0].mxu0
        %v575 = vadd.f32 0.0, %v574
        %v576 = vpop.f32.mrb[0].mxu0
        %577 = vmatprep.mubr.bf16.mxu0 0
        %578 = vmatmul.mubr.bf16.gmra.mrb[0].mxu0 %v422
        %v579 = vpop.f32.mrb[0].mxu0
        %v580 = vadd.f32 0.0, %v579
        %v581 = vpop.f32.mrb[0].mxu0
        %v582 = vpop.f32.mrb[0].mxu0
        %v583 = vadd.f32 0.0, %v582
        %v584 = vpop.f32.mrb[0].mxu0
        %585 = vmatprep.mubr.bf16.mxu0 0
        %586 = vmatmul.mubr.bf16.gmra.mrb[0].mxu0 %v423
        %v587 = vpop.f32.mrb[0].mxu0
        %v588 = vadd.f32 0.0, %v587
        %v589 = vpop.f32.mrb[0].mxu0
        %v590 = vpop.f32.mrb[0].mxu0
        %v591 = vadd.f32 0.0, %v590
        %v592 = vpop.f32.mrb[0].mxu0
        %593 = vmatprep.mubr.bf16.mxu0 0
        %594 = vmatmul.mubr.bf16.gmra.mrb[0].mxu0 %v424
        %v595 = vpop.f32.mrb[0].mxu0
        %v596 = vadd.f32 0.0, %v595
        %v597 = vpop.f32.mrb[0].mxu0
        %v598 = vpop.f32.mrb[0].mxu0
        %v599 = vadd.f32 0.0, %v598
        %v600 = vpop.f32.mrb[0].mxu0
        %601 = vdwg.mxu0
        %v602 = vadd.f32 %v425, %v540
        %v603 = vadd.f32 %v426, %v543
        %v604 = vadd.f32 %v427, %v548
        %v605 = vadd.f32 %v428, %v551
        %v606 = vadd.f32 %v429, %v556
        %v607 = vadd.f32 %v430, %v559
        %v608 = vadd.f32 %v431, %v564
        %v609 = vadd.f32 %v432, %v567
        %v610 = vadd.f32 %v433, %v572
        %v611 = vadd.f32 %v434, %v575
        %v612 = vadd.f32 %v435, %v580
        %v613 = vadd.f32 %v436, %v583
        %v614 = vadd.f32 %v437, %v588
        %v615 = vadd.f32 %v438, %v591
        %v616 = vadd.f32 %v439, %v596
        %v617 = vadd.f32 %v440, %v599
        %618 = vst [vmem:[#allocation2] sm:$0xff] %v602
        %619 = vst [vmem:[#allocation2 + $0x8] sm:$0xff] %v603
        %620 = vst [vmem:[#allocation2 + $0x10] sm:$0xff] %v604
        %621 = vst [vmem:[#allocation2 + $0x18] sm:$0xff] %v605
        %622 = vst [vmem:[#allocation2 + $0x20] sm:$0xff] %v606
        %623 = vst [vmem:[#allocation2 + $0x28] sm:$0xff] %v607
        %624 = vst [vmem:[#allocation2 + $0x30] sm:$0xff] %v608
        %625 = vst [vmem:[#allocation2 + $0x38] sm:$0xff] %v609
        %626 = vst [vmem:[#allocation2 + $0x40] sm:$0xff] %v610
        %627 = vst [vmem:[#allocation2 + $0x48] sm:$0xff] %v611
        %628 = vst [vmem:[#allocation2 + $0x50] sm:$0xff] %v612
        %629 = vst [vmem:[#allocation2 + $0x58] sm:$0xff] %v613
        %630 = vst [vmem:[#allocation2 + $0x60] sm:$0xff] %v614
        %631 = vst [vmem:[#allocation2 + $0x68] sm:$0xff] %v615
        %632 = vst [vmem:[#allocation2 + $0x70] sm:$0xff] %v616
        %633 = vst [vmem:[#allocation2 + $0x78] sm:$0xff] %v617
        %p634 = scmp.eq.s32.totalorder %s30, 2
        // Predicated region
        $region91: #{tpu_custom_call.1} parent=73 // pred_check
          %p635 = pneg %p634
        $region92: #{tpu_custom_call.1} parent=73 // pred_check_branch
          %637 = sbr.rel (%p635) target = $region94
        $region93: #{tpu_custom_call.1} parent=73 // pred_region
          %v638 = vld [vmem:[%s389] sm:$0xff]
          %v639 = vld [vmem:[%s389 + $0x8] sm:$0xff]
          %v640 = vld [vmem:[%s389 + $0x10] sm:$0xff]
          %v641 = vld [vmem:[%s389 + $0x18] sm:$0xff]
          %v642 = vld [vmem:[%s389 + $0x20] sm:$0xff]
          %v643 = vld [vmem:[%s389 + $0x28] sm:$0xff]
          %v644 = vld [vmem:[%s389 + $0x30] sm:$0xff]
          %v645 = vld [vmem:[%s389 + $0x38] sm:$0xff]
          %v646 = vld [vmem:[%s389 + $0x40] sm:$0xff]
          %v647 = vld [vmem:[%s389 + $0x48] sm:$0xff]
          %v648 = vld [vmem:[%s389 + $0x50] sm:$0xff]
          %v649 = vld [vmem:[%s389 + $0x58] sm:$0xff]
          %v650 = vld [vmem:[%s389 + $0x60] sm:$0xff]
          %v651 = vld [vmem:[%s389 + $0x68] sm:$0xff]
          %v652 = vld [vmem:[%s389 + $0x70] sm:$0xff]
          %v653 = vld [vmem:[%s389 + $0x78] sm:$0xff]
          %v654 = vld [vmem:[#allocation2] sm:$0xff]
          %v655 = vld [vmem:[#allocation2 + $0x8] sm:$0xff]
          %v656 = vld [vmem:[#allocation2 + $0x10] sm:$0xff]
          %v657 = vld [vmem:[#allocation2 + $0x18] sm:$0xff]
          %v658 = vld [vmem:[#allocation2 + $0x20] sm:$0xff]
          %v659 = vld [vmem:[#allocation2 + $0x28] sm:$0xff]
          %v660 = vld [vmem:[#allocation2 + $0x30] sm:$0xff]
          %v661 = vld [vmem:[#allocation2 + $0x38] sm:$0xff]
          %v662 = vld [vmem:[#allocation2 + $0x40] sm:$0xff]
          %v663 = vld [vmem:[#allocation2 + $0x48] sm:$0xff]
          %v664 = vld [vmem:[#allocation2 + $0x50] sm:$0xff]
          %v665 = vld [vmem:[#allocation2 + $0x58] sm:$0xff]
          %v666 = vld [vmem:[#allocation2 + $0x60] sm:$0xff]
          %v667 = vld [vmem:[#allocation2 + $0x68] sm:$0xff]
          %v668 = vld [vmem:[#allocation2 + $0x70] sm:$0xff]
          %v669 = vld [vmem:[#allocation2 + $0x78] sm:$0xff]
          %671 = vset.pattern.permute.xlu0 0
          %672 = vperm.xlu0 %671, %v638
          %v673 = vpop.permute.xlu0 %672
          %676 = vset.pattern.permute.xlu0 0
          %677 = vperm.xlu0 %676, %v639
          %v678 = vpop.permute.xlu0 %677
          %681 = vset.pattern.permute.xlu0 0
          %682 = vperm.xlu0 %681, %v640
          %v683 = vpop.permute.xlu0 %682
          %686 = vset.pattern.permute.xlu0 0
          %687 = vperm.xlu0 %686, %v641
          %v688 = vpop.permute.xlu0 %687
          %691 = vset.pattern.permute.xlu0 0
          %692 = vperm.xlu0 %691, %v642
          %v693 = vpop.permute.xlu0 %692
          %696 = vset.pattern.permute.xlu0 0
          %697 = vperm.xlu0 %696, %v643
          %v698 = vpop.permute.xlu0 %697
          %701 = vset.pattern.permute.xlu0 0
          %702 = vperm.xlu0 %701, %v644
          %v703 = vpop.permute.xlu0 %702
          %706 = vset.pattern.permute.xlu0 0
          %707 = vperm.xlu0 %706, %v645
          %v708 = vpop.permute.xlu0 %707
          %711 = vset.pattern.permute.xlu0 0
          %712 = vperm.xlu0 %711, %v646
          %v713 = vpop.permute.xlu0 %712
          %716 = vset.pattern.permute.xlu0 0
          %717 = vperm.xlu0 %716, %v647
          %v718 = vpop.permute.xlu0 %717
          %721 = vset.pattern.permute.xlu0 0
          %722 = vperm.xlu0 %721, %v648
          %v723 = vpop.permute.xlu0 %722
          %726 = vset.pattern.permute.xlu0 0
          %727 = vperm.xlu0 %726, %v649
          %v728 = vpop.permute.xlu0 %727
          %731 = vset.pattern.permute.xlu0 0
          %732 = vperm.xlu0 %731, %v650
          %v733 = vpop.permute.xlu0 %732
          %736 = vset.pattern.permute.xlu0 0
          %737 = vperm.xlu0 %736, %v651
          %v738 = vpop.permute.xlu0 %737
          %741 = vset.pattern.permute.xlu0 0
          %742 = vperm.xlu0 %741, %v652
          %v743 = vpop.permute.xlu0 %742
          %746 = vset.pattern.permute.xlu0 0
          %747 = vperm.xlu0 %746, %v653
          %v748 = vpop.permute.xlu0 %747
          %v750 = vmul.f32 %v654, %v673
          %v751 = vmul.f32 %v655, %v678
          %v752 = vmul.f32 %v656, %v683
          %v753 = vmul.f32 %v657, %v688
          %v754 = vmul.f32 %v658, %v693
          %v755 = vmul.f32 %v659, %v698
          %v756 = vmul.f32 %v660, %v703
          %v757 = vmul.f32 %v661, %v708
          %v758 = vmul.f32 %v662, %v713
          %v759 = vmul.f32 %v663, %v718
          %v760 = vmul.f32 %v664, %v723
          %v761 = vmul.f32 %v665, %v728
          %v762 = vmul.f32 %v666, %v733
          %v763 = vmul.f32 %v667, %v738
          %v764 = vmul.f32 %v668, %v743
          %v765 = vmul.f32 %v669, %v748
          %v766 = vmul.f32 %v750, %v750
          %v767 = vmul.f32 %v751, %v751
          %v768 = vmul.f32 %v752, %v752
          %v769 = vmul.f32 %v753, %v753
          %v770 = vmul.f32 %v754, %v754
          %v771 = vmul.f32 %v755, %v755
          %v772 = vmul.f32 %v756, %v756
          %v773 = vmul.f32 %v757, %v757
          %v774 = vmul.f32 %v758, %v758
          %v775 = vmul.f32 %v759, %v759
          %v776 = vmul.f32 %v760, %v760
          %v777 = vmul.f32 %v761, %v761
          %v778 = vmul.f32 %v762, %v762
          %v779 = vmul.f32 %v763, %v763
          %v780 = vmul.f32 %v764, %v764
          %v781 = vmul.f32 %v765, %v765
          %782 = vadd.xlane.f32.xlu0 %v766
          %v783 = vpop.xlane.xlu0 %782
          %784 = vadd.xlane.f32.xlu0 %v767
          %v785 = vpop.xlane.xlu0 %784
          %786 = vadd.xlane.f32.xlu0 %v768
          %v787 = vpop.xlane.xlu0 %786
          %788 = vadd.xlane.f32.xlu0 %v769
          %v789 = vpop.xlane.xlu0 %788
          %790 = vadd.xlane.f32.xlu0 %v770
          %v791 = vpop.xlane.xlu0 %790
          %792 = vadd.xlane.f32.xlu0 %v771
          %v793 = vpop.xlane.xlu0 %792
          %794 = vadd.xlane.f32.xlu0 %v772
          %v795 = vpop.xlane.xlu0 %794
          %796 = vadd.xlane.f32.xlu0 %v773
          %v797 = vpop.xlane.xlu0 %796
          %798 = vadd.xlane.f32.xlu0 %v774
          %v799 = vpop.xlane.xlu0 %798
          %800 = vadd.xlane.f32.xlu0 %v775
          %v801 = vpop.xlane.xlu0 %800
          %802 = vadd.xlane.f32.xlu0 %v776
          %v803 = vpop.xlane.xlu0 %802
          %804 = vadd.xlane.f32.xlu0 %v777
          %v805 = vpop.xlane.xlu0 %804
          %806 = vadd.xlane.f32.xlu0 %v778
          %v807 = vpop.xlane.xlu0 %806
          %808 = vadd.xlane.f32.xlu0 %v779
          %v809 = vpop.xlane.xlu0 %808
          %810 = vadd.xlane.f32.xlu0 %v780
          %v811 = vpop.xlane.xlu0 %810
          %812 = vadd.xlane.f32.xlu0 %v781
          %v813 = vpop.xlane.xlu0 %812
          %v814 = vmax.f32 %v783, 1e-24
          %v815 = vmax.f32 %v785, 1e-24
          %v816 = vmax.f32 %v787, 1e-24
          %v817 = vmax.f32 %v789, 1e-24
          %v818 = vmax.f32 %v791, 1e-24
          %v819 = vmax.f32 %v793, 1e-24
          %v820 = vmax.f32 %v795, 1e-24
          %v821 = vmax.f32 %v797, 1e-24
          %v822 = vmax.f32 %v799, 1e-24
          %v823 = vmax.f32 %v801, 1e-24
          %v824 = vmax.f32 %v803, 1e-24
          %v825 = vmax.f32 %v805, 1e-24
          %v826 = vmax.f32 %v807, 1e-24
          %v827 = vmax.f32 %v809, 1e-24
          %v828 = vmax.f32 %v811, 1e-24
          %v829 = vmax.f32 %v813, 1e-24
          %v830 = vrsqrt.pop %v814
          %v831 = vrsqrt.pop %v815
          %v832 = vrsqrt.pop %v816
          %v833 = vrsqrt.pop %v817
          %v834 = vrsqrt.pop %v818
          %v835 = vrsqrt.pop %v819
          %v836 = vrsqrt.pop %v820
          %v837 = vrsqrt.pop %v821
          %v838 = vrsqrt.pop %v822
          %v839 = vrsqrt.pop %v823
          %v840 = vrsqrt.pop %v824
          %v841 = vrsqrt.pop %v825
          %v842 = vrsqrt.pop %v826
          %v843 = vrsqrt.pop %v827
          %v844 = vrsqrt.pop %v828
          %v845 = vrsqrt.pop %v829
          %v846 = vmul.f32 %v750, %v830
          %v847 = vmul.f32 %v751, %v831
          %v848 = vmul.f32 %v752, %v832
          %v849 = vmul.f32 %v753, %v833
          %v850 = vmul.f32 %v754, %v834
          %v851 = vmul.f32 %v755, %v835
          %v852 = vmul.f32 %v756, %v836
          %v853 = vmul.f32 %v757, %v837
          %v854 = vmul.f32 %v758, %v838
          %v855 = vmul.f32 %v759, %v839
          %v856 = vmul.f32 %v760, %v840
          %v857 = vmul.f32 %v761, %v841
          %v858 = vmul.f32 %v762, %v842
          %v859 = vmul.f32 %v763, %v843
          %v860 = vmul.f32 %v764, %v844
          %v861 = vmul.f32 %v765, %v845
          %v862 = vpack.c.bf16 %v847, %v846
          %v863 = vpack.c.bf16 %v849, %v848
          %v864 = vpack.c.bf16 %v851, %v850
          %v865 = vpack.c.bf16 %v853, %v852
          %v866 = vpack.c.bf16 %v855, %v854
          %v867 = vpack.c.bf16 %v857, %v856
          %v868 = vpack.c.bf16 %v859, %v858
          %v869 = vpack.c.bf16 %v861, %v860
          %v870 = vld [vmem:[%s341] sm:$0xf]
          %v871 = vld [vmem:[%s341 + $0x4] sm:$0xf]
          %v872 = vld [vmem:[%s341 + $0x8] sm:$0xf]
          %v873 = vld [vmem:[%s341 + $0xc] sm:$0xf]
          %v874 = vld [vmem:[%s341 + $0x10] sm:$0xf]
          %v875 = vld [vmem:[%s341 + $0x14] sm:$0xf]
          %v876 = vld [vmem:[%s341 + $0x18] sm:$0xf]
          %v877 = vld [vmem:[%s341 + $0x1c] sm:$0xf]
          %v878 = vld [vmem:[%s341 + $0x20] sm:$0xf]
          %v879 = vld [vmem:[%s341 + $0x24] sm:$0xf]
          %v880 = vld [vmem:[%s341 + $0x28] sm:$0xf]
          %v881 = vld [vmem:[%s341 + $0x2c] sm:$0xf]
          %v882 = vld [vmem:[%s341 + $0x30] sm:$0xf]
          %v883 = vld [vmem:[%s341 + $0x34] sm:$0xf]
          %v884 = vld [vmem:[%s341 + $0x38] sm:$0xf]
          %v885 = vld [vmem:[%s341 + $0x3c] sm:$0xf]
          %v902 = vunpack.c.l.b16 %v870
          %v903 = vunpack.c.l.b16 %v871
          %v904 = vunpack.c.l.b16 %v872
          %v905 = vunpack.c.l.b16 %v873
          %v906 = vunpack.c.l.b16 %v874
          %v907 = vunpack.c.l.b16 %v875
          %v908 = vunpack.c.l.b16 %v876
          %v909 = vunpack.c.l.b16 %v877
          %v910 = vunpack.c.l.b16 %v878
          %v911 = vunpack.c.l.b16 %v879
          %v912 = vunpack.c.l.b16 %v880
          %v913 = vunpack.c.l.b16 %v881
          %v914 = vunpack.c.l.b16 %v882
          %v915 = vunpack.c.l.b16 %v883
          %v916 = vunpack.c.l.b16 %v884
          %v917 = vunpack.c.l.b16 %v885
          %v918 = vpack.c.b16 %v903, %v902
          %v919 = vpack.c.b16 %v905, %v904
          %v920 = vpack.c.b16 %v907, %v906
          %v921 = vpack.c.b16 %v909, %v908
          %v922 = vpack.c.b16 %v911, %v910
          %v923 = vpack.c.b16 %v913, %v912
          %v924 = vpack.c.b16 %v915, %v914
          %v925 = vpack.c.b16 %v917, %v916
          %v934 = vld [vmem:[%s4] sm:$0xf]
          %v935 = vld [vmem:[%s4 + $0x4] sm:$0xf]
          %v936 = vld [vmem:[%s4 + $0x8] sm:$0xf]
          %v937 = vld [vmem:[%s4 + $0xc] sm:$0xf]
          %v938 = vld [vmem:[%s4 + $0x10] sm:$0xf]
          %v939 = vld [vmem:[%s4 + $0x14] sm:$0xf]
          %v940 = vld [vmem:[%s4 + $0x18] sm:$0xf]
          %v941 = vld [vmem:[%s4 + $0x1c] sm:$0xf]
          %v942 = vld [vmem:[%s4 + $0x20] sm:$0xf]
          %v943 = vld [vmem:[%s4 + $0x24] sm:$0xf]
          %v944 = vld [vmem:[%s4 + $0x28] sm:$0xf]
          %v945 = vld [vmem:[%s4 + $0x2c] sm:$0xf]
          %v946 = vld [vmem:[%s4 + $0x30] sm:$0xf]
          %v947 = vld [vmem:[%s4 + $0x34] sm:$0xf]
          %v948 = vld [vmem:[%s4 + $0x38] sm:$0xf]
          %v949 = vld [vmem:[%s4 + $0x3c] sm:$0xf]
          %v966 = vunpack.c.l.b16 %v934
          %v967 = vunpack.c.l.b16 %v935
          %v968 = vunpack.c.l.b16 %v936
          %v969 = vunpack.c.l.b16 %v937
          %v970 = vunpack.c.l.b16 %v938
          %v971 = vunpack.c.l.b16 %v939
          %v972 = vunpack.c.l.b16 %v940
          %v973 = vunpack.c.l.b16 %v941
          %v974 = vunpack.c.l.b16 %v942
          %v975 = vunpack.c.l.b16 %v943
          %v976 = vunpack.c.l.b16 %v944
          %v977 = vunpack.c.l.b16 %v945
          %v978 = vunpack.c.l.b16 %v946
          %v979 = vunpack.c.l.b16 %v947
          %v980 = vunpack.c.l.b16 %v948
          %v981 = vunpack.c.l.b16 %v949
          %v982 = vpack.c.b16 %v967, %v966
          %v983 = vpack.c.b16 %v969, %v968
          %v984 = vpack.c.b16 %v971, %v970
          %v985 = vpack.c.b16 %v973, %v972
          %v986 = vpack.c.b16 %v975, %v974
          %v987 = vpack.c.b16 %v977, %v976
          %v988 = vpack.c.b16 %v979, %v978
          %v989 = vpack.c.b16 %v981, %v980
          %998 = vmatprep.subr.bf16.mxu0 0
          %999 = vmatpush1.bf16.msra.mxu0 %v982
          %1000 = vmatprep.subr.bf16.mxu0 0
          %1001 = vmatpush1.bf16.msra.mxu0 %v983
          %1002 = vmatprep.subr.bf16.mxu0 0
          %1003 = vmatpush1.bf16.msra.mxu0 %v984
          %1004 = vmatprep.subr.bf16.mxu0 0
          %1005 = vmatpush1.bf16.msra.mxu0 %v985
          %1006 = vmatprep.subr.bf16.mxu0 0
          %1007 = vmatpush1.bf16.msra.mxu0 %v986
          %1008 = vmatprep.subr.bf16.mxu0 0
          %1009 = vmatpush1.bf16.msra.mxu0 %v987
          %1010 = vmatprep.subr.bf16.mxu0 0
          %1011 = vmatpush1.bf16.msra.mxu0 %v988
          %1012 = vmatprep.subr.bf16.mxu0 0
          %1013 = vmatpush1.bf16.msra.mxu0 %v989
          %1014 = vmatprep.subr.bf16.mxu0 0
          %1015 = vmatpush1.bf16.msra.mxu0 0
          %1016 = vmatprep.subr.bf16.mxu0 0
          %1017 = vmatpush1.bf16.msra.mxu0 0
          %1018 = vmatprep.subr.bf16.mxu0 0
          %1019 = vmatpush1.bf16.msra.mxu0 0
          %1020 = vmatprep.subr.bf16.mxu0 0
          %1021 = vmatpush1.bf16.msra.mxu0 0
          %1022 = vmatprep.subr.bf16.mxu0 0
          %1023 = vmatpush1.bf16.msra.mxu0 0
          %1024 = vmatprep.subr.bf16.mxu0 0
          %1025 = vmatpush1.bf16.msra.mxu0 0
          %1026 = vmatprep.subr.bf16.mxu0 0
          %1027 = vmatpush1.bf16.msra.mxu0 0
          %1028 = vmatprep.subr.bf16.mxu0 0
          %1029 = vmatpush1.bf16.msra.mxu0 0
          %1030 = vmatprep.mubr.bf16.mxu0 0
          %1031 = vmatmul.mubr.bf16.gmra.mrb[0].mxu0 %v862
          %v1032 = vpop.f32.mrb[0].mxu0
          %v1033 = vadd.f32 0.0, %v1032
          %v1034 = vpop.f32.mrb[0].mxu0
          %v1035 = vpop.f32.mrb[0].mxu0
          %v1036 = vadd.f32 0.0, %v1035
          %v1037 = vpop.f32.mrb[0].mxu0
          %1038 = vmatprep.mubr.bf16.mxu0 0
          %1039 = vmatmul.mubr.bf16.gmra.mrb[0].mxu0 %v863
          %v1040 = vpop.f32.mrb[0].mxu0
          %v1041 = vadd.f32 0.0, %v1040
          %v1042 = vpop.f32.mrb[0].mxu0
          %v1043 = vpop.f32.mrb[0].mxu0
          %v1044 = vadd.f32 0.0, %v1043
          %v1045 = vpop.f32.mrb[0].mxu0
          %1046 = vmatprep.mubr.bf16.mxu0 0
          %1047 = vmatmul.mubr.bf16.gmra.mrb[0].mxu0 %v864
          %v1048 = vpop.f32.mrb[0].mxu0
          %v1049 = vadd.f32 0.0, %v1048
          %v1050 = vpop.f32.mrb[0].mxu0
          %v1051 = vpop.f32.mrb[0].mxu0
          %v1052 = vadd.f32 0.0, %v1051
          %v1053 = vpop.f32.mrb[0].mxu0
          %1054 = vmatprep.mubr.bf16.mxu0 0
          %1055 = vmatmul.mubr.bf16.gmra.mrb[0].mxu0 %v865
          %v1056 = vpop.f32.mrb[0].mxu0
          %v1057 = vadd.f32 0.0, %v1056
          %v1058 = vpop.f32.mrb[0].mxu0
          %v1059 = vpop.f32.mrb[0].mxu0
          %v1060 = vadd.f32 0.0, %v1059
          %v1061 = vpop.f32.mrb[0].mxu0
          %1062 = vmatprep.mubr.bf16.mxu0 0
          %1063 = vmatmul.mubr.bf16.gmra.mrb[0].mxu0 %v866
          %v1064 = vpop.f32.mrb[0].mxu0
          %v1065 = vadd.f32 0.0, %v1064
          %v1066 = vpop.f32.mrb[0].mxu0
          %v1067 = vpop.f32.mrb[0].mxu0
          %v1068 = vadd.f32 0.0, %v1067
          %v1069 = vpop.f32.mrb[0].mxu0
          %1070 = vmatprep.mubr.bf16.mxu0 0
          %1071 = vmatmul.mubr.bf16.gmra.mrb[0].mxu0 %v867
          %v1072 = vpop.f32.mrb[0].mxu0
          %v1073 = vadd.f32 0.0, %v1072
          %v1074 = vpop.f32.mrb[0].mxu0
          %v1075 = vpop.f32.mrb[0].mxu0
          %v1076 = vadd.f32 0.0, %v1075
          %v1077 = vpop.f32.mrb[0].mxu0
          %1078 = vmatprep.mubr.bf16.mxu0 0
          %1079 = vmatmul.mubr.bf16.gmra.mrb[0].mxu0 %v868
          %v1080 = vpop.f32.mrb[0].mxu0
          %v1081 = vadd.f32 0.0, %v1080
          %v1082 = vpop.f32.mrb[0].mxu0
          %v1083 = vpop.f32.mrb[0].mxu0
          %v1084 = vadd.f32 0.0, %v1083
          %v1085 = vpop.f32.mrb[0].mxu0
          %1086 = vmatprep.mubr.bf16.mxu0 0
          %1087 = vmatmul.mubr.bf16.gmra.mrb[0].mxu0 %v869
          %v1088 = vpop.f32.mrb[0].mxu0
          %v1089 = vadd.f32 0.0, %v1088
          %v1090 = vpop.f32.mrb[0].mxu0
          %v1091 = vpop.f32.mrb[0].mxu0
          %v1092 = vadd.f32 0.0, %v1091
          %v1093 = vpop.f32.mrb[0].mxu0
          %1094 = vmatprep.mubr.bf16.mxu0 0
          %1095 = vmatmul.mubr.bf16.gmra.mrb[0].mxu0 %v918
          %v1096 = vpop.f32.mrb[0].mxu0
          %v1097 = vadd.f32 0.0, %v1096
          %v1098 = vpop.f32.mrb[0].mxu0
          %v1099 = vpop.f32.mrb[0].mxu0
          %v1100 = vadd.f32 0.0, %v1099
          %v1101 = vpop.f32.mrb[0].mxu0
          %1102 = vmatprep.mubr.bf16.mxu0 0
          %1103 = vmatmul.mubr.bf16.gmra.mrb[0].mxu0 %v919
          %v1104 = vpop.f32.mrb[0].mxu0
          %v1105 = vadd.f32 0.0, %v1104
          %v1106 = vpop.f32.mrb[0].mxu0
          %v1107 = vpop.f32.mrb[0].mxu0
          %v1108 = vadd.f32 0.0, %v1107
          %v1109 = vpop.f32.mrb[0].mxu0
          %1110 = vmatprep.mubr.bf16.mxu0 0
          %1111 = vmatmul.mubr.bf16.gmra.mrb[0].mxu0 %v920
          %v1112 = vpop.f32.mrb[0].mxu0
          %v1113 = vadd.f32 0.0, %v1112
          %v1114 = vpop.f32.mrb[0].mxu0
          %v1115 = vpop.f32.mrb[0].mxu0
          %v1116 = vadd.f32 0.0, %v1115
          %v1117 = vpop.f32.mrb[0].mxu0
          %1118 = vmatprep.mubr.bf16.mxu0 0
          %1119 = vmatmul.mubr.bf16.gmra.mrb[0].mxu0 %v921
          %v1120 = vpop.f32.mrb[0].mxu0
          %v1121 = vadd.f32 0.0, %v1120
          %v1122 = vpop.f32.mrb[0].mxu0
          %v1123 = vpop.f32.mrb[0].mxu0
          %v1124 = vadd.f32 0.0, %v1123
          %v1125 = vpop.f32.mrb[0].mxu0
          %1126 = vmatprep.mubr.bf16.mxu0 0
          %1127 = vmatmul.mubr.bf16.gmra.mrb[0].mxu0 %v922
          %v1128 = vpop.f32.mrb[0].mxu0
          %v1129 = vadd.f32 0.0, %v1128
          %v1130 = vpop.f32.mrb[0].mxu0
          %v1131 = vpop.f32.mrb[0].mxu0
          %v1132 = vadd.f32 0.0, %v1131
          %v1133 = vpop.f32.mrb[0].mxu0
          %1134 = vmatprep.mubr.bf16.mxu0 0
          %1135 = vmatmul.mubr.bf16.gmra.mrb[0].mxu0 %v923
          %v1136 = vpop.f32.mrb[0].mxu0
          %v1137 = vadd.f32 0.0, %v1136
          %v1138 = vpop.f32.mrb[0].mxu0
          %v1139 = vpop.f32.mrb[0].mxu0
          %v1140 = vadd.f32 0.0, %v1139
          %v1141 = vpop.f32.mrb[0].mxu0
          %1142 = vmatprep.mubr.bf16.mxu0 0
          %1143 = vmatmul.mubr.bf16.gmra.mrb[0].mxu0 %v924
          %v1144 = vpop.f32.mrb[0].mxu0
          %v1145 = vadd.f32 0.0, %v1144
          %v1146 = vpop.f32.mrb[0].mxu0
          %v1147 = vpop.f32.mrb[0].mxu0
          %v1148 = vadd.f32 0.0, %v1147
          %v1149 = vpop.f32.mrb[0].mxu0
          %1150 = vmatprep.mubr.bf16.mxu0 0
          %1151 = vmatmul.mubr.bf16.gmra.mrb[0].mxu0 %v925
          %v1152 = vpop.f32.mrb[0].mxu0
          %v1153 = vadd.f32 0.0, %v1152
          %v1154 = vpop.f32.mrb[0].mxu0
          %v1155 = vpop.f32.mrb[0].mxu0
          %v1156 = vadd.f32 0.0, %v1155
          %v1157 = vpop.f32.mrb[0].mxu0
          %1158 = vdwg.mxu0
          %v1159 = vsub.f32 0.0, %v1033
          %v1160 = vsub.f32 0.0, %v1036
          %v1161 = vsub.f32 0.0, %v1041
          %v1162 = vsub.f32 0.0, %v1044
          %v1163 = vsub.f32 0.0, %v1049
          %v1164 = vsub.f32 0.0, %v1052
          %v1165 = vsub.f32 0.0, %v1057
          %v1166 = vsub.f32 0.0, %v1060
          %v1167 = vsub.f32 0.0, %v1065
          %v1168 = vsub.f32 0.0, %v1068
          %v1169 = vsub.f32 0.0, %v1073
          %v1170 = vsub.f32 0.0, %v1076
          %v1171 = vsub.f32 0.0, %v1081
          %v1172 = vsub.f32 0.0, %v1084
          %v1173 = vsub.f32 0.0, %v1089
          %v1174 = vsub.f32 0.0, %v1092
          %v1175 = vmul.f32 %v1159, %v1159
          %v1176 = vmul.f32 %v1160, %v1160
          %v1177 = vmul.f32 %v1161, %v1161
          %v1178 = vmul.f32 %v1162, %v1162
          %v1179 = vmul.f32 %v1163, %v1163
          %v1180 = vmul.f32 %v1164, %v1164
          %v1181 = vmul.f32 %v1165, %v1165
          %v1182 = vmul.f32 %v1166, %v1166
          %v1183 = vmul.f32 %v1167, %v1167
          %v1184 = vmul.f32 %v1168, %v1168
          %v1185 = vmul.f32 %v1169, %v1169
          %v1186 = vmul.f32 %v1170, %v1170
          %v1187 = vmul.f32 %v1171, %v1171
          %v1188 = vmul.f32 %v1172, %v1172
          %v1189 = vmul.f32 %v1173, %v1173
          %v1190 = vmul.f32 %v1174, %v1174
          %1191 = vadd.xlane.f32.xlu0 %v1175
          %v1192 = vpop.xlane.xlu0 %1191
          %1193 = vadd.xlane.f32.xlu0 %v1176
          %v1194 = vpop.xlane.xlu0 %1193
          %1195 = vadd.xlane.f32.xlu0 %v1177
          %v1196 = vpop.xlane.xlu0 %1195
          %1197 = vadd.xlane.f32.xlu0 %v1178
          %v1198 = vpop.xlane.xlu0 %1197
          %1199 = vadd.xlane.f32.xlu0 %v1179
          %v1200 = vpop.xlane.xlu0 %1199
          %1201 = vadd.xlane.f32.xlu0 %v1180
          %v1202 = vpop.xlane.xlu0 %1201
          %1203 = vadd.xlane.f32.xlu0 %v1181
          %v1204 = vpop.xlane.xlu0 %1203
          %1205 = vadd.xlane.f32.xlu0 %v1182
          %v1206 = vpop.xlane.xlu0 %1205
          %1207 = vadd.xlane.f32.xlu0 %v1183
          %v1208 = vpop.xlane.xlu0 %1207
          %1209 = vadd.xlane.f32.xlu0 %v1184
          %v1210 = vpop.xlane.xlu0 %1209
          %1211 = vadd.xlane.f32.xlu0 %v1185
          %v1212 = vpop.xlane.xlu0 %1211
          %1213 = vadd.xlane.f32.xlu0 %v1186
          %v1214 = vpop.xlane.xlu0 %1213
          %1215 = vadd.xlane.f32.xlu0 %v1187
          %v1216 = vpop.xlane.xlu0 %1215
          %1217 = vadd.xlane.f32.xlu0 %v1188
          %v1218 = vpop.xlane.xlu0 %1217
          %1219 = vadd.xlane.f32.xlu0 %v1189
          %v1220 = vpop.xlane.xlu0 %1219
          %1221 = vadd.xlane.f32.xlu0 %v1190
          %v1222 = vpop.xlane.xlu0 %1221
          %v1223 = vmax.f32 %v1192, 1e-24
          %v1224 = vmax.f32 %v1194, 1e-24
          %v1225 = vmax.f32 %v1196, 1e-24
          %v1226 = vmax.f32 %v1198, 1e-24
          %v1227 = vmax.f32 %v1200, 1e-24
          %v1228 = vmax.f32 %v1202, 1e-24
          %v1229 = vmax.f32 %v1204, 1e-24
          %v1230 = vmax.f32 %v1206, 1e-24
          %v1231 = vmax.f32 %v1208, 1e-24
          %v1232 = vmax.f32 %v1210, 1e-24
          %v1233 = vmax.f32 %v1212, 1e-24
          %v1234 = vmax.f32 %v1214, 1e-24
          %v1235 = vmax.f32 %v1216, 1e-24
          %v1236 = vmax.f32 %v1218, 1e-24
          %v1237 = vmax.f32 %v1220, 1e-24
          %v1238 = vmax.f32 %v1222, 1e-24
          %v1239 = vrsqrt.pop %v1223
          %v1240 = vrsqrt.pop %v1224
          %v1241 = vrsqrt.pop %v1225
          %v1242 = vrsqrt.pop %v1226
          %v1243 = vrsqrt.pop %v1227
          %v1244 = vrsqrt.pop %v1228
          %v1245 = vrsqrt.pop %v1229
          %v1246 = vrsqrt.pop %v1230
          %v1247 = vrsqrt.pop %v1231
          %v1248 = vrsqrt.pop %v1232
          %v1249 = vrsqrt.pop %v1233
          %v1250 = vrsqrt.pop %v1234
          %v1251 = vrsqrt.pop %v1235
          %v1252 = vrsqrt.pop %v1236
          %v1253 = vrsqrt.pop %v1237
          %v1254 = vrsqrt.pop %v1238
          %v1255 = vmul.f32 %v1159, %v1239
          %v1256 = vmul.f32 %v1160, %v1240
          %v1257 = vmul.f32 %v1161, %v1241
          %v1258 = vmul.f32 %v1162, %v1242
          %v1259 = vmul.f32 %v1163, %v1243
          %v1260 = vmul.f32 %v1164, %v1244
          %v1261 = vmul.f32 %v1165, %v1245
          %v1262 = vmul.f32 %v1166, %v1246
          %v1263 = vmul.f32 %v1167, %v1247
          %v1264 = vmul.f32 %v1168, %v1248
          %v1265 = vmul.f32 %v1169, %v1249
          %v1266 = vmul.f32 %v1170, %v1250
          %v1267 = vmul.f32 %v1171, %v1251
          %v1268 = vmul.f32 %v1172, %v1252
          %v1269 = vmul.f32 %v1173, %v1253
          %v1270 = vmul.f32 %v1174, %v1254
          %v1271 = vmul.f32 %v1097, 0.3
          %v1272 = vmul.f32 %v1100, 0.3
          %v1273 = vmul.f32 %v1105, 0.3
          %v1274 = vmul.f32 %v1108, 0.3
          %v1275 = vmul.f32 %v1113, 0.3
          %v1276 = vmul.f32 %v1116, 0.3
          %v1277 = vmul.f32 %v1121, 0.3
          %v1278 = vmul.f32 %v1124, 0.3
          %v1279 = vmul.f32 %v1129, 0.3
          %v1280 = vmul.f32 %v1132, 0.3
          %v1281 = vmul.f32 %v1137, 0.3
          %v1282 = vmul.f32 %v1140, 0.3
          %v1283 = vmul.f32 %v1145, 0.3
          %v1284 = vmul.f32 %v1148, 0.3
          %v1285 = vmul.f32 %v1153, 0.3
          %v1286 = vmul.f32 %v1156, 0.3
          %v1287 = vadd.f32 %v1255, %v1271
          %v1288 = vadd.f32 %v1256, %v1272
          %v1289 = vadd.f32 %v1257, %v1273
          %v1290 = vadd.f32 %v1258, %v1274
          %v1291 = vadd.f32 %v1259, %v1275
          %v1292 = vadd.f32 %v1260, %v1276
          %v1293 = vadd.f32 %v1261, %v1277
          %v1294 = vadd.f32 %v1262, %v1278
          %v1295 = vadd.f32 %v1263, %v1279
          %v1296 = vadd.f32 %v1264, %v1280
          %v1297 = vadd.f32 %v1265, %v1281
          %v1298 = vadd.f32 %v1266, %v1282
          %v1299 = vadd.f32 %v1267, %v1283
          %v1300 = vadd.f32 %v1268, %v1284
          %v1301 = vadd.f32 %v1269, %v1285
          %v1302 = vadd.f32 %v1270, %v1286
          %1303 = vst [vmem:[%s381] sm:$0xff] %v1287
          %1304 = vst [vmem:[%s381 + $0x8] sm:$0xff] %v1288
          %1305 = vst [vmem:[%s381 + $0x10] sm:$0xff] %v1289
          %1306 = vst [vmem:[%s381 + $0x18] sm:$0xff] %v1290
          %1307 = vst [vmem:[%s381 + $0x20] sm:$0xff] %v1291
          %1308 = vst [vmem:[%s381 + $0x28] sm:$0xff] %v1292
          %1309 = vst [vmem:[%s381 + $0x30] sm:$0xff] %v1293
          %1310 = vst [vmem:[%s381 + $0x38] sm:$0xff] %v1294
          %1311 = vst [vmem:[%s381 + $0x40] sm:$0xff] %v1295
          %1312 = vst [vmem:[%s381 + $0x48] sm:$0xff] %v1296
          %1313 = vst [vmem:[%s381 + $0x50] sm:$0xff] %v1297
          %1314 = vst [vmem:[%s381 + $0x58] sm:$0xff] %v1298
          %1315 = vst [vmem:[%s381 + $0x60] sm:$0xff] %v1299
          %1316 = vst [vmem:[%s381 + $0x68] sm:$0xff] %v1300
          %1317 = vst [vmem:[%s381 + $0x70] sm:$0xff] %v1301
          %1318 = vst [vmem:[%s381 + $0x78] sm:$0xff] %v1302
        $region94: #{tpu_custom_call.1} parent=73 // pred_fallthru
          _
        %s1319 = sand.u32 %s172, 1
        %s1320 = scalar_lea.sflag [#allocation6], %s1319
        %s1321 = sand.u32 %s172, 1
        %s1322 = smul.addr %s1321, 128
        %s1323 = scalar_lea.vmem [#allocation9], %s1322
        // Predicated region
        $region95: #{tpu_custom_call.1} parent=73 // pred_check
          %p1324 = pneg %p182
        $region96: #{tpu_custom_call.1} parent=73 // pred_check_branch
          %1326 = sbr.rel (%p1324) target = $region98
        $region97: #{tpu_custom_call.1} parent=73 // pred_region
          %s1327 = smul.u32 16, %s29
          %s1329 = ssub.s32 2048, 2048
          %1330 = vsyncadd %s1320, %s1329
          %s1331 = smul.addr %s1327, 128
          %s1332 = scalar_lea.hbm %s5, %s1331
          %s1333 = sshll.u32 %s1323, 4
          %s1334 = int_to_ptr.vmem [resolvable:$true] %s1333
          %1339 = dma.vmem_to_hbm [thread:$0]  %s1334, 2048, %s1332, %s1320, 128, 128, 8
        $region98: #{tpu_custom_call.1} parent=73 // pred_fallthru
          _
      $region74: #{tpu_custom_call.1} parent=5 // pred_fallthru
        _
      %p1340 = scmp.le.s32.totalorder 2, %s20
      // Predicated region
      $region99: #{tpu_custom_call.1} parent=5 // pred_check
        %p1341 = pneg %p1340
      $region100: #{tpu_custom_call.1} parent=5 // pred_check_branch
        %1343 = sbr.rel (%p1341) target = $region102
      $region101: #{tpu_custom_call.1} parent=5 // pred_region
        %s1344 = ssub.s32 %s20, 2
        // Predicated region
        $region103: #{tpu_custom_call.1} parent=101 // pred_check
          %p1345 = pneg %p188
        $region104: #{tpu_custom_call.1} parent=101 // pred_check_branch
          %1347 = sbr.rel (%p1345) target = $region106
        $region105: #{tpu_custom_call.1} parent=101 // pred_region
          %s1348 = sand.u32 %s173, 1
          %s1349 = scalar_lea.sflag [#allocation6], %s1348
          %s1350 = sand.u32 %s173, 1
          %s1351 = smul.addr %s1350, 128
          %s1352 = scalar_lea.vmem [#allocation9], %s1351
          %1353 = dma.done %s1349, 2048
        $region106: #{tpu_custom_call.1} parent=101 // pred_fallthru
          _
      $region102: #{tpu_custom_call.1} parent=5 // pred_fallthru
        _
    $region6: #{tpu_custom_call.1} parent=1 // loop_footer
      %s24 = sadd.s32 1, %s20
    $region7: #{tpu_custom_call.1} parent=1 // loop_footer_branch
      %19 = sbr.rel target = $region3
    $region8: #{tpu_custom_call.1} parent=1 // loop_exit
      _
    %1354 = vsyncpa [#allocation5], 1
    %s1355 = scalar_lea.sflag [#allocation5], 1
    %1356 = vsyncpa %s1355, 1
    %1357 = vsyncpa [#allocation8], 1
    %s1358 = scalar_lea.sflag [#allocation8], 1
    %1359 = vsyncpa %s1358, 1
    %1360 = vsyncpa [#allocation6], 1
    %s1361 = scalar_lea.sflag [#allocation6], 1
    %1362 = vsyncpa %s1361, 1

</llo_original>
